<compile_context>
chip_gen: v7x
topology: tpu7x:2x2x1
jax: 0.10.0
libtpu: 0.0.40
codegen_flags: <defaults>
</compile_context>

<pallas_src>
import functools

import jax
import jax.numpy as jnp
from jax.experimental import pallas as pl
from jax.experimental.pallas import tpu as pltpu


def style_disperser_kernel(ids_ref, wa_ref, wb_ref, out_ref, ord_scr,
                           *, T, B, Bp, H, V, same, margin):
  f32, bf16 = jnp.float32, jnp.bfloat16
  TB = T * Bp
  H2, V2 = 2 * H, 2 * V

  # ------------------------------------------------------------- layer 0 ----
  # Doubled one-hot: rows [0:TB] carry the forward-time ids, rows [TB:2TB] the
  # time-reversed ids shifted by V.  One matmul against the block-diagonal
  # folded table (embedding @ embLinear @ [wih_f0 | wih_b0]) yields both
  # directions' hoisted input contributions, already step-ordered, with no
  # reversal concatenates anywhere.
  ids = ids_ref[...]                                              # (2TB,1) i32
  col = jax.lax.broadcasted_iota(jnp.int32, (2 * TB, V2), 1)
  d2 = (ids == col).astype(f32)                                   # (2TB, 2V)
  u_both = jnp.dot(d2, wa_ref[0:V2, :], preferred_element_type=f32)  # (2TB,2H)
  b0 = wa_ref[V2 + H2:V2 + H2 + 1, :]                             # (1, 2H)
  u0 = u_both[0:TB, :] + u_both[TB:2 * TB, :] + b0                # (TB, 2H)

  # Fused bidirectional recurrence: state = [h_fwd | h_bwd] (Bp, 2H), a single
  # bf16 MXU matmul (f32 acc) + tanh per step.  Only whh0 stays live in vregs.
  whh0 = wa_ref[V2:V2 + H2, :].astype(bf16)                       # (2H, 2H)
  h = jnp.tanh(u0[0:Bp, :])                                       # step 0, h_{-1}=0
  ord_scr[0:Bp, 0:H] = h[:, 0:H]
  ord_scr[(T - 1) * Bp:T * Bp, H:] = h[:, H:]
  for s in range(1, T):
    h = jnp.tanh(jnp.dot(h.astype(bf16), whh0, preferred_element_type=f32)
                 + u0[s * Bp:(s + 1) * Bp, :])
    # Stream the layer-0 output TIME-ordered into scratch: fwd half belongs to
    # time s, bwd half to time T-1-s.  Stores are off the serial chain.
    ord_scr[s * Bp:(s + 1) * Bp, 0:H] = h[:, 0:H]
    ord_scr[(T - 1 - s) * Bp:(T - s) * Bp, H:] = h[:, H:]

  # ------------------------------------------------------------- layer 1 ----
  out_l0 = ord_scr[...]                                           # (TB, 2H) time-ordered
  # Forward direction: hoisted input contribution (bias pre-added once).
  u1 = (jnp.dot(out_l0, wb_ref[0:H2, :], preferred_element_type=f32)
        + wb_ref[5 * H:5 * H + 1, :])                             # (TB, H)

  # Backward direction, output at t = T-1 (its first step, h0 = 0 => whh_b1
  # contributes nothing; valid because the reference reads output_[:, -1, :]).
  h1b = jnp.tanh(
      jnp.dot(out_l0[(T - 1) * Bp:TB, :], wb_ref[H2:2 * H2, :],
              preferred_element_type=f32)
      + wb_ref[5 * H + 8:5 * H + 9, :])                           # (Bp, H)

  # Forward recurrence (bf16 operands, f32 accumulation).
  whh1 = wb_ref[2 * H2:2 * H2 + H, :].astype(bf16)                # (H, H)
  h1 = jnp.tanh(u1[0:Bp, :])
  for t in range(1, T):
    h1 = jnp.tanh(jnp.dot(h1.astype(bf16), whh1, preferred_element_type=f32)
                  + u1[t * Bp:(t + 1) * Bp, :])

  out = jnp.concatenate([h1, h1b], axis=-1)                       # (Bp, 2H)

  # ------------------------------------ torch.renorm(p=2, dim=0, maxnorm=1) --
  norm2 = jnp.sum(out * out, axis=-1, keepdims=True)
  # torch uses 1/(norm + 1e-7); rsqrt drops the epsilon (<= 1e-7 rel. diff).
  scale = jnp.where(norm2 > 1.0, jax.lax.rsqrt(norm2), 1.0)
  z = out * scale

  # ---------------------------------------------- StyleDisperser statistics --
  # Padded batch rows (b >= B) are never read below.
  true_z = z[0:same, :]
  rand_z = z[same:B, :]
  tmean_ = jnp.mean(true_z, axis=0, keepdims=True)                # (1, 2H)
  tmean = tmean_ * jax.lax.rsqrt(jnp.sum(tmean_ * tmean_))        # no eps (matches torch)
  s_true = jnp.sum(true_z * tmean, axis=-1, keepdims=True)        # (same, 1)
  s_rand = jnp.sum(rand_z * tmean, axis=-1, keepdims=True)        # (B-same, 1)
  true_std = 1.0 - jnp.mean(s_true)
  rand_std = -margin + jnp.mean(jnp.maximum(margin, s_rand))

  out_ref[...] = jnp.concatenate(
      [jnp.reshape(true_std, (1, 1)), jnp.reshape(rand_std, (1, 1))],
      axis=-1).astype(f32)


def init_params(key, vocab, embed_dim, hidden):
  ks = jax.random.split(key, 16)
  s = 0.1
  H, H2 = hidden, 2 * hidden
  def w(k, shape):
    return (s * jax.random.normal(k, shape)).astype(jnp.float32)
  return {
      "embedding": w(ks[0], (vocab, embed_dim)),
      "w_el": w(ks[1], (embed_dim, H)), "b_el": w(ks[2], (1, H)),
      # RNN layer 0 (input H), forward / backward; bias = b_ih + b_hh fused
      "wih_f0": w(ks[3], (H, H)), "whh_f0": w(ks[4], (H, H)), "b_f0": w(ks[5], (1, H)),
      "wih_b0": w(ks[6], (H, H)), "whh_b0": w(ks[7], (H, H)), "b_b0": w(ks[8], (1, H)),
      # RNN layer 1 (input 2H), forward / backward
      "wih_f1": w(ks[9], (H2, H)), "whh_f1": w(ks[10], (H, H)), "b_f1": w(ks[11], (1, H)),
      "wih_b1": w(ks[12], (H2, H)), "whh_b1": w(ks[13], (H, H)), "b_b1": w(ks[14], (1, H)),
  }


def pack_params(p):
  """One-time packing of the module parameters into two lane-packed slabs."""
  f32 = jnp.float32
  H = p["w_el"].shape[1]
  V = p["embedding"].shape[0]
  emb = p["embedding"] @ p["w_el"]                                # (V, H)
  tabF = emb @ p["wih_f0"]                                        # (V, H)
  tabB = emb @ p["wih_b0"]                                        # (V, H)
  zV = jnp.zeros((V, H), f32)
  zH = jnp.zeros((H, H), f32)
  tab_blk = jnp.concatenate(                                      # (2V, 2H)
      [jnp.concatenate([tabF, zV], axis=1),
       jnp.concatenate([zV, tabB], axis=1)], axis=0)
  whh0_blk = jnp.concatenate(                                     # (2H, 2H)
      [jnp.concatenate([p["whh_f0"], zH], axis=1),
       jnp.concatenate([zH, p["whh_b0"]], axis=1)], axis=0)
  b0_eff = jnp.concatenate(                                       # (1, 2H)
      [p["b_el"] @ p["wih_f0"] + p["b_f0"],
       p["b_el"] @ p["wih_b0"] + p["b_b0"]], axis=1)
  wa = jnp.concatenate([tab_blk, whh0_blk, b0_eff], axis=0).astype(f32)

  wb = jnp.concatenate([
      p["wih_f1"],                                                # rows [0, 2H)
      p["wih_b1"],                                                # rows [2H, 4H)
      p["whh_f1"],                                                # rows [4H, 5H)
      p["b_f1"],                                                  # row  5H
      jnp.zeros((7, H), f32),                                     # pad to 8-row offset
      p["b_b1"],                                                  # row  5H + 8
  ], axis=0).astype(f32)
  # NOTE: whh_b1 intentionally dropped (layer-1 backward output at t=T-1 is
  #       its first step, h0 == 0), matching output_[:, -1, :] in the reference.
  return {"wa": wa, "wb": wb}


def style_disperser_forward(seqs, packed, *, same=2, margin=0.7):
  B, T = seqs.shape
  wa, wb = packed["wa"], packed["wb"]
  H = wb.shape[1]
  V = (wa.shape[0] - 2 * H - 1) // 2
  Bp = ((B + 7) // 8) * 8                 # pad batch to the f32 sublane tile
  seqs_p = jnp.pad(seqs, ((0, Bp - B), (0, 0))) if Bp != B else seqs

  # Time-major token ids, forward order then time-reversed order (shifted by V
  # into the doubled vocab) -- the only wrapper-side data prep (tiny int32).
  idf = jnp.transpose(seqs_p).reshape(T * Bp)
  idb = jnp.transpose(seqs_p[:, ::-1]).reshape(T * Bp) + V
  ids2 = jnp.concatenate([idf, idb]).reshape(2 * T * Bp, 1).astype(jnp.int32)

  vmem = pl.BlockSpec(memory_space=pltpu.MemorySpace.VMEM)
  kern = functools.partial(style_disperser_kernel,
                           T=T, B=B, Bp=Bp, H=H, V=V, same=same, margin=margin)
  out = pl.pallas_call(
      kern,
      out_shape=jax.ShapeDtypeStruct((1, 2), jnp.float32),
      in_specs=[vmem, vmem, vmem],
      out_specs=vmem,
      scratch_shapes=[pltpu.VMEM((T * Bp, 2 * H), jnp.float32)],
  )(ids2, wa, wb)
  return out[0, 0], out[0, 1]


if __name__ == "__main__":
  vocab, embed_dim, hidden = 16, 128, 32
  B, T, same = 4, 8, 2

  key = jax.random.PRNGKey(0)
  k_params, k_seq = jax.random.split(key)
  params = init_params(k_params, vocab, embed_dim, hidden)
  packed = pack_params(params)                 # one-time, outside the jit
  seqs = jax.random.randint(k_seq, (B, T), 0, vocab, dtype=jnp.int32)

  fwd = jax.jit(functools.partial(style_disperser_forward, same=same, margin=0.7))
  true_std, rand_std = fwd(seqs, packed)
  jax.block_until_ready((true_std, rand_std))
  print("KERNEL_OK")
</pallas_src>

<mosaic_0001>
module attributes {stable_mosaic.version = 11 : i64} {
  func.func @style_disperser_kernel(%arg0: memref<128x1xi32, #tpu.memory_space<vmem>>, %arg1: memref<97x64xf32, #tpu.memory_space<vmem>>, %arg2: memref<169x32xf32, #tpu.memory_space<vmem>>, %arg3: memref<1x2xf32, #tpu.memory_space<vmem>>, %arg4: memref<64x64xf32, #tpu.memory_space<vmem>>) attributes {dimension_semantics = [], scalar_prefetch = 0 : i64, scratch_operands = 1 : i64, tpu.core_type = #tpu.core_type<tc>} {
    %c0 = arith.constant 0 : index
    %c0_0 = arith.constant 0 : index
    %0 = vector.load %arg0[%c0, %c0_0] : memref<128x1xi32, #tpu.memory_space<vmem>>, vector<128x1xi32>
    %1 = tpu.iota {dimensions = array<i32: 1>} : vector<128x32xi32>
    %2 = vector.broadcast %0 : vector<128x1xi32> to vector<128x32xi32>
    %3 = arith.cmpi eq, %2, %1 : vector<128x32xi32>
    %4 = arith.extui %3 : vector<128x32xi1> to vector<128x32xi32>
    %5 = arith.sitofp %4 : vector<128x32xi32> to vector<128x32xf32>
    %c0_1 = arith.constant 0 : index
    %c0_2 = arith.constant 0 : index
    %6 = vector.load %arg1[%c0_1, %c0_2] : memref<97x64xf32, #tpu.memory_space<vmem>>, vector<32x64xf32>
    %cst = arith.constant dense<0.000000e+00> : vector<128x64xf32>
    %7 = tpu.matmul %5, %6, %cst {dimension_numbers = #tpu.dot_dimension_numbers<[1], [0], [0], [1], [0, 0, 1, 1], [], []>} : vector<128x32xf32>, vector<32x64xf32>, vector<128x64xf32> -> vector<128x64xf32>
    %c96 = arith.constant 96 : index
    %c0_3 = arith.constant 0 : index
    %8 = vector.load %arg1[%c96, %c0_3] : memref<97x64xf32, #tpu.memory_space<vmem>>, vector<1x64xf32>
    %9 = vector.extract_strided_slice %7 {offsets = [0, 0], sizes = [64, 64], strides = [1, 1]} : vector<128x64xf32> to vector<64x64xf32>
    %10 = vector.extract_strided_slice %7 {offsets = [64, 0], sizes = [64, 64], strides = [1, 1]} : vector<128x64xf32> to vector<64x64xf32>
    %11 = arith.addf %9, %10 : vector<64x64xf32>
    %12 = vector.broadcast %8 : vector<1x64xf32> to vector<64x64xf32>
    %13 = arith.addf %11, %12 : vector<64x64xf32>
    %c32 = arith.constant 32 : index
    %c0_4 = arith.constant 0 : index
    %14 = vector.load %arg1[%c32, %c0_4] : memref<97x64xf32, #tpu.memory_space<vmem>>, vector<64x64xf32>
    %15 = arith.truncf %14 : vector<64x64xf32> to vector<64x64xbf16>
    %16 = vector.extract_strided_slice %13 {offsets = [0, 0], sizes = [8, 64], strides = [1, 1]} : vector<64x64xf32> to vector<8x64xf32>
    %17 = math.tanh %16 : vector<8x64xf32>
    %18 = vector.extract_strided_slice %17 {offsets = [0, 0], sizes = [8, 32], strides = [1, 1]} : vector<8x64xf32> to vector<8x32xf32>
    %c0_5 = arith.constant 0 : index
    %c0_6 = arith.constant 0 : index
    %19 = vector.load %arg4[%c0_5, %c0_6] : memref<64x64xf32, #tpu.memory_space<vmem>>, vector<8x32xf32>
    tpu.vector_store %arg4[%c0_5, %c0_6], %18 {strides = array<i32>} : memref<64x64xf32, #tpu.memory_space<vmem>>, vector<8x32xf32>,
    %20 = vector.extract_strided_slice %17 {offsets = [0, 32], sizes = [8, 32], strides = [1, 1]} : vector<8x64xf32> to vector<8x32xf32>
    %c56 = arith.constant 56 : index
    %c32_7 = arith.constant 32 : index
    %21 = vector.load %arg4[%c56, %c32_7] : memref<64x64xf32, #tpu.memory_space<vmem>>, vector<8x32xf32>
    tpu.vector_store %arg4[%c56, %c32_7], %20 {strides = array<i32>} : memref<64x64xf32, #tpu.memory_space<vmem>>, vector<8x32xf32>,
    %22 = arith.truncf %17 : vector<8x64xf32> to vector<8x64xbf16>
    %cst_8 = arith.constant dense<0.000000e+00> : vector<8x64xf32>
    %23 = tpu.matmul %22, %15, %cst_8 {dimension_numbers = #tpu.dot_dimension_numbers<[1], [0], [0], [1], [0, 0, 1, 1], [], []>} : vector<8x64xbf16>, vector<64x64xbf16>, vector<8x64xf32> -> vector<8x64xf32>
    %24 = vector.extract_strided_slice %13 {offsets = [8, 0], sizes = [8, 64], strides = [1, 1]} : vector<64x64xf32> to vector<8x64xf32>
    %25 = arith.addf %23, %24 : vector<8x64xf32>
    %26 = math.tanh %25 : vector<8x64xf32>
    %27 = vector.extract_strided_slice %26 {offsets = [0, 0], sizes = [8, 32], strides = [1, 1]} : vector<8x64xf32> to vector<8x32xf32>
    %c8 = arith.constant 8 : index
    %c0_9 = arith.constant 0 : index
    %28 = vector.load %arg4[%c8, %c0_9] : memref<64x64xf32, #tpu.memory_space<vmem>>, vector<8x32xf32>
    tpu.vector_store %arg4[%c8, %c0_9], %27 {strides = array<i32>} : memref<64x64xf32, #tpu.memory_space<vmem>>, vector<8x32xf32>,
    %29 = vector.extract_strided_slice %26 {offsets = [0, 32], sizes = [8, 32], strides = [1, 1]} : vector<8x64xf32> to vector<8x32xf32>
    %c48 = arith.constant 48 : index
    %c32_10 = arith.constant 32 : index
    %30 = vector.load %arg4[%c48, %c32_10] : memref<64x64xf32, #tpu.memory_space<vmem>>, vector<8x32xf32>
    tpu.vector_store %arg4[%c48, %c32_10], %29 {strides = array<i32>} : memref<64x64xf32, #tpu.memory_space<vmem>>, vector<8x32xf32>,
    %31 = arith.truncf %26 : vector<8x64xf32> to vector<8x64xbf16>
    %cst_11 = arith.constant dense<0.000000e+00> : vector<8x64xf32>
    %32 = tpu.matmul %31, %15, %cst_11 {dimension_numbers = #tpu.dot_dimension_numbers<[1], [0], [0], [1], [0, 0, 1, 1], [], []>} : vector<8x64xbf16>, vector<64x64xbf16>, vector<8x64xf32> -> vector<8x64xf32>
    %33 = vector.extract_strided_slice %13 {offsets = [16, 0], sizes = [8, 64], strides = [1, 1]} : vector<64x64xf32> to vector<8x64xf32>
    %34 = arith.addf %32, %33 : vector<8x64xf32>
    %35 = math.tanh %34 : vector<8x64xf32>
    %36 = vector.extract_strided_slice %35 {offsets = [0, 0], sizes = [8, 32], strides = [1, 1]} : vector<8x64xf32> to vector<8x32xf32>
    %c16 = arith.constant 16 : index
    %c0_12 = arith.constant 0 : index
    %37 = vector.load %arg4[%c16, %c0_12] : memref<64x64xf32, #tpu.memory_space<vmem>>, vector<8x32xf32>
    tpu.vector_store %arg4[%c16, %c0_12], %36 {strides = array<i32>} : memref<64x64xf32, #tpu.memory_space<vmem>>, vector<8x32xf32>,
    %38 = vector.extract_strided_slice %35 {offsets = [0, 32], sizes = [8, 32], strides = [1, 1]} : vector<8x64xf32> to vector<8x32xf32>
    %c40 = arith.constant 40 : index
    %c32_13 = arith.constant 32 : index
    %39 = vector.load %arg4[%c40, %c32_13] : memref<64x64xf32, #tpu.memory_space<vmem>>, vector<8x32xf32>
    tpu.vector_store %arg4[%c40, %c32_13], %38 {strides = array<i32>} : memref<64x64xf32, #tpu.memory_space<vmem>>, vector<8x32xf32>,
    %40 = arith.truncf %35 : vector<8x64xf32> to vector<8x64xbf16>
    %cst_14 = arith.constant dense<0.000000e+00> : vector<8x64xf32>
    %41 = tpu.matmul %40, %15, %cst_14 {dimension_numbers = #tpu.dot_dimension_numbers<[1], [0], [0], [1], [0, 0, 1, 1], [], []>} : vector<8x64xbf16>, vector<64x64xbf16>, vector<8x64xf32> -> vector<8x64xf32>
    %42 = vector.extract_strided_slice %13 {offsets = [24, 0], sizes = [8, 64], strides = [1, 1]} : vector<64x64xf32> to vector<8x64xf32>
    %43 = arith.addf %41, %42 : vector<8x64xf32>
    %44 = math.tanh %43 : vector<8x64xf32>
    %45 = vector.extract_strided_slice %44 {offsets = [0, 0], sizes = [8, 32], strides = [1, 1]} : vector<8x64xf32> to vector<8x32xf32>
    %c24 = arith.constant 24 : index
    %c0_15 = arith.constant 0 : index
    %46 = vector.load %arg4[%c24, %c0_15] : memref<64x64xf32, #tpu.memory_space<vmem>>, vector<8x32xf32>
    tpu.vector_store %arg4[%c24, %c0_15], %45 {strides = array<i32>} : memref<64x64xf32, #tpu.memory_space<vmem>>, vector<8x32xf32>,
    %47 = vector.extract_strided_slice %44 {offsets = [0, 32], sizes = [8, 32], strides = [1, 1]} : vector<8x64xf32> to vector<8x32xf32>
    %c32_16 = arith.constant 32 : index
    %c32_17 = arith.constant 32 : index
    %48 = vector.load %arg4[%c32_16, %c32_17] : memref<64x64xf32, #tpu.memory_space<vmem>>, vector<8x32xf32>
    tpu.vector_store %arg4[%c32_16, %c32_17], %47 {strides = array<i32>} : memref<64x64xf32, #tpu.memory_space<vmem>>, vector<8x32xf32>,
    %49 = arith.truncf %44 : vector<8x64xf32> to vector<8x64xbf16>
    %cst_18 = arith.constant dense<0.000000e+00> : vector<8x64xf32>
    %50 = tpu.matmul %49, %15, %cst_18 {dimension_numbers = #tpu.dot_dimension_numbers<[1], [0], [0], [1], [0, 0, 1, 1], [], []>} : vector<8x64xbf16>, vector<64x64xbf16>, vector<8x64xf32> -> vector<8x64xf32>
    %51 = vector.extract_strided_slice %13 {offsets = [32, 0], sizes = [8, 64], strides = [1, 1]} : vector<64x64xf32> to vector<8x64xf32>
    %52 = arith.addf %50, %51 : vector<8x64xf32>
    %53 = math.tanh %52 : vector<8x64xf32>
    %54 = vector.extract_strided_slice %53 {offsets = [0, 0], sizes = [8, 32], strides = [1, 1]} : vector<8x64xf32> to vector<8x32xf32>
    %c32_19 = arith.constant 32 : index
    %c0_20 = arith.constant 0 : index
    %55 = vector.load %arg4[%c32_19, %c0_20] : memref<64x64xf32, #tpu.memory_space<vmem>>, vector<8x32xf32>
    tpu.vector_store %arg4[%c32_19, %c0_20], %54 {strides = array<i32>} : memref<64x64xf32, #tpu.memory_space<vmem>>, vector<8x32xf32>,
    %56 = vector.extract_strided_slice %53 {offsets = [0, 32], sizes = [8, 32], strides = [1, 1]} : vector<8x64xf32> to vector<8x32xf32>
    %c24_21 = arith.constant 24 : index
    %c32_22 = arith.constant 32 : index
    %57 = vector.load %arg4[%c24_21, %c32_22] : memref<64x64xf32, #tpu.memory_space<vmem>>, vector<8x32xf32>
    tpu.vector_store %arg4[%c24_21, %c32_22], %56 {strides = array<i32>} : memref<64x64xf32, #tpu.memory_space<vmem>>, vector<8x32xf32>,
    %58 = arith.truncf %53 : vector<8x64xf32> to vector<8x64xbf16>
    %cst_23 = arith.constant dense<0.000000e+00> : vector<8x64xf32>
    %59 = tpu.matmul %58, %15, %cst_23 {dimension_numbers = #tpu.dot_dimension_numbers<[1], [0], [0], [1], [0, 0, 1, 1], [], []>} : vector<8x64xbf16>, vector<64x64xbf16>, vector<8x64xf32> -> vector<8x64xf32>
    %60 = vector.extract_strided_slice %13 {offsets = [40, 0], sizes = [8, 64], strides = [1, 1]} : vector<64x64xf32> to vector<8x64xf32>
    %61 = arith.addf %59, %60 : vector<8x64xf32>
    %62 = math.tanh %61 : vector<8x64xf32>
    %63 = vector.extract_strided_slice %62 {offsets = [0, 0], sizes = [8, 32], strides = [1, 1]} : vector<8x64xf32> to vector<8x32xf32>
    %c40_24 = arith.constant 40 : index
    %c0_25 = arith.constant 0 : index
    %64 = vector.load %arg4[%c40_24, %c0_25] : memref<64x64xf32, #tpu.memory_space<vmem>>, vector<8x32xf32>
    tpu.vector_store %arg4[%c40_24, %c0_25], %63 {strides = array<i32>} : memref<64x64xf32, #tpu.memory_space<vmem>>, vector<8x32xf32>,
    %65 = vector.extract_strided_slice %62 {offsets = [0, 32], sizes = [8, 32], strides = [1, 1]} : vector<8x64xf32> to vector<8x32xf32>
    %c16_26 = arith.constant 16 : index
    %c32_27 = arith.constant 32 : index
    %66 = vector.load %arg4[%c16_26, %c32_27] : memref<64x64xf32, #tpu.memory_space<vmem>>, vector<8x32xf32>
    tpu.vector_store %arg4[%c16_26, %c32_27], %65 {strides = array<i32>} : memref<64x64xf32, #tpu.memory_space<vmem>>, vector<8x32xf32>,
    %67 = arith.truncf %62 : vector<8x64xf32> to vector<8x64xbf16>
    %cst_28 = arith.constant dense<0.000000e+00> : vector<8x64xf32>
    %68 = tpu.matmul %67, %15, %cst_28 {dimension_numbers = #tpu.dot_dimension_numbers<[1], [0], [0], [1], [0, 0, 1, 1], [], []>} : vector<8x64xbf16>, vector<64x64xbf16>, vector<8x64xf32> -> vector<8x64xf32>
    %69 = vector.extract_strided_slice %13 {offsets = [48, 0], sizes = [8, 64], strides = [1, 1]} : vector<64x64xf32> to vector<8x64xf32>
    %70 = arith.addf %68, %69 : vector<8x64xf32>
    %71 = math.tanh %70 : vector<8x64xf32>
    %72 = vector.extract_strided_slice %71 {offsets = [0, 0], sizes = [8, 32], strides = [1, 1]} : vector<8x64xf32> to vector<8x32xf32>
    %c48_29 = arith.constant 48 : index
    %c0_30 = arith.constant 0 : index
    %73 = vector.load %arg4[%c48_29, %c0_30] : memref<64x64xf32, #tpu.memory_space<vmem>>, vector<8x32xf32>
    tpu.vector_store %arg4[%c48_29, %c0_30], %72 {strides = array<i32>} : memref<64x64xf32, #tpu.memory_space<vmem>>, vector<8x32xf32>,
    %74 = vector.extract_strided_slice %71 {offsets = [0, 32], sizes = [8, 32], strides = [1, 1]} : vector<8x64xf32> to vector<8x32xf32>
    %c8_31 = arith.constant 8 : index
    %c32_32 = arith.constant 32 : index
    %75 = vector.load %arg4[%c8_31, %c32_32] : memref<64x64xf32, #tpu.memory_space<vmem>>, vector<8x32xf32>
    tpu.vector_store %arg4[%c8_31, %c32_32], %74 {strides = array<i32>} : memref<64x64xf32, #tpu.memory_space<vmem>>, vector<8x32xf32>,
    %76 = arith.truncf %71 : vector<8x64xf32> to vector<8x64xbf16>
    %cst_33 = arith.constant dense<0.000000e+00> : vector<8x64xf32>
    %77 = tpu.matmul %76, %15, %cst_33 {dimension_numbers = #tpu.dot_dimension_numbers<[1], [0], [0], [1], [0, 0, 1, 1], [], []>} : vector<8x64xbf16>, vector<64x64xbf16>, vector<8x64xf32> -> vector<8x64xf32>
    %78 = vector.extract_strided_slice %13 {offsets = [56, 0], sizes = [8, 64], strides = [1, 1]} : vector<64x64xf32> to vector<8x64xf32>
    %79 = arith.addf %77, %78 : vector<8x64xf32>
    %80 = math.tanh %79 : vector<8x64xf32>
    %81 = vector.extract_strided_slice %80 {offsets = [0, 0], sizes = [8, 32], strides = [1, 1]} : vector<8x64xf32> to vector<8x32xf32>
    %c56_34 = arith.constant 56 : index
    %c0_35 = arith.constant 0 : index
    %82 = vector.load %arg4[%c56_34, %c0_35] : memref<64x64xf32, #tpu.memory_space<vmem>>, vector<8x32xf32>
    tpu.vector_store %arg4[%c56_34, %c0_35], %81 {strides = array<i32>} : memref<64x64xf32, #tpu.memory_space<vmem>>, vector<8x32xf32>,
    %83 = vector.extract_strided_slice %80 {offsets = [0, 32], sizes = [8, 32], strides = [1, 1]} : vector<8x64xf32> to vector<8x32xf32>
    %c0_36 = arith.constant 0 : index
    %c32_37 = arith.constant 32 : index
    %84 = vector.load %arg4[%c0_36, %c32_37] : memref<64x64xf32, #tpu.memory_space<vmem>>, vector<8x32xf32>
    tpu.vector_store %arg4[%c0_36, %c32_37], %83 {strides = array<i32>} : memref<64x64xf32, #tpu.memory_space<vmem>>, vector<8x32xf32>,
    %c0_38 = arith.constant 0 : index
    %c0_39 = arith.constant 0 : index
    %85 = vector.load %arg4[%c0_38, %c0_39] : memref<64x64xf32, #tpu.memory_space<vmem>>, vector<64x64xf32>
    %c0_40 = arith.constant 0 : index
    %c0_41 = arith.constant 0 : index
    %86 = vector.load %arg2[%c0_40, %c0_41] : memref<169x32xf32, #tpu.memory_space<vmem>>, vector<64x32xf32>
    %cst_42 = arith.constant dense<0.000000e+00> : vector<64x32xf32>
    %87 = tpu.matmul %85, %86, %cst_42 {dimension_numbers = #tpu.dot_dimension_numbers<[1], [0], [0], [1], [0, 0, 1, 1], [], []>} : vector<64x64xf32>, vector<64x32xf32>, vector<64x32xf32> -> vector<64x32xf32>
    %c160 = arith.constant 160 : index
    %c0_43 = arith.constant 0 : index
    %88 = vector.load %arg2[%c160, %c0_43] : memref<169x32xf32, #tpu.memory_space<vmem>>, vector<1x32xf32>
    %89 = vector.broadcast %88 : vector<1x32xf32> to vector<64x32xf32>
    %90 = arith.addf %87, %89 : vector<64x32xf32>
    %91 = vector.extract_strided_slice %85 {offsets = [56, 0], sizes = [8, 64], strides = [1, 1]} : vector<64x64xf32> to vector<8x64xf32>
    %c64 = arith.constant 64 : index
    %c0_44 = arith.constant 0 : index
    %92 = vector.load %arg2[%c64, %c0_44] : memref<169x32xf32, #tpu.memory_space<vmem>>, vector<64x32xf32>
    %cst_45 = arith.constant dense<0.000000e+00> : vector<8x32xf32>
    %93 = tpu.matmul %91, %92, %cst_45 {dimension_numbers = #tpu.dot_dimension_numbers<[1], [0], [0], [1], [0, 0, 1, 1], [], []>} : vector<8x64xf32>, vector<64x32xf32>, vector<8x32xf32> -> vector<8x32xf32>
    %c168 = arith.constant 168 : index
    %c0_46 = arith.constant 0 : index
    %94 = vector.load %arg2[%c168, %c0_46] : memref<169x32xf32, #tpu.memory_space<vmem>>, vector<1x32xf32>
    %95 = vector.broadcast %94 : vector<1x32xf32> to vector<8x32xf32>
    %96 = arith.addf %93, %95 : vector<8x32xf32>
    %97 = math.tanh %96 : vector<8x32xf32>
    %c128 = arith.constant 128 : index
    %c0_47 = arith.constant 0 : index
    %98 = vector.load %arg2[%c128, %c0_47] : memref<169x32xf32, #tpu.memory_space<vmem>>, vector<32x32xf32>
    %99 = arith.truncf %98 : vector<32x32xf32> to vector<32x32xbf16>
    %100 = vector.extract_strided_slice %90 {offsets = [0, 0], sizes = [8, 32], strides = [1, 1]} : vector<64x32xf32> to vector<8x32xf32>
    %101 = math.tanh %100 : vector<8x32xf32>
    %102 = arith.truncf %101 : vector<8x32xf32> to vector<8x32xbf16>
    %cst_48 = arith.constant dense<0.000000e+00> : vector<8x32xf32>
    %103 = tpu.matmul %102, %99, %cst_48 {dimension_numbers = #tpu.dot_dimension_numbers<[1], [0], [0], [1], [0, 0, 1, 1], [], []>} : vector<8x32xbf16>, vector<32x32xbf16>, vector<8x32xf32> -> vector<8x32xf32>
    %104 = vector.extract_strided_slice %90 {offsets = [8, 0], sizes = [8, 32], strides = [1, 1]} : vector<64x32xf32> to vector<8x32xf32>
    %105 = arith.addf %103, %104 : vector<8x32xf32>
    %106 = math.tanh %105 : vector<8x32xf32>
    %107 = arith.truncf %106 : vector<8x32xf32> to vector<8x32xbf16>
    %cst_49 = arith.constant dense<0.000000e+00> : vector<8x32xf32>
    %108 = tpu.matmul %107, %99, %cst_49 {dimension_numbers = #tpu.dot_dimension_numbers<[1], [0], [0], [1], [0, 0, 1, 1], [], []>} : vector<8x32xbf16>, vector<32x32xbf16>, vector<8x32xf32> -> vector<8x32xf32>
    %109 = vector.extract_strided_slice %90 {offsets = [16, 0], sizes = [8, 32], strides = [1, 1]} : vector<64x32xf32> to vector<8x32xf32>
    %110 = arith.addf %108, %109 : vector<8x32xf32>
    %111 = math.tanh %110 : vector<8x32xf32>
    %112 = arith.truncf %111 : vector<8x32xf32> to vector<8x32xbf16>
    %cst_50 = arith.constant dense<0.000000e+00> : vector<8x32xf32>
    %113 = tpu.matmul %112, %99, %cst_50 {dimension_numbers = #tpu.dot_dimension_numbers<[1], [0], [0], [1], [0, 0, 1, 1], [], []>} : vector<8x32xbf16>, vector<32x32xbf16>, vector<8x32xf32> -> vector<8x32xf32>
    %114 = vector.extract_strided_slice %90 {offsets = [24, 0], sizes = [8, 32], strides = [1, 1]} : vector<64x32xf32> to vector<8x32xf32>
    %115 = arith.addf %113, %114 : vector<8x32xf32>
    %116 = math.tanh %115 : vector<8x32xf32>
    %117 = arith.truncf %116 : vector<8x32xf32> to vector<8x32xbf16>
    %cst_51 = arith.constant dense<0.000000e+00> : vector<8x32xf32>
    %118 = tpu.matmul %117, %99, %cst_51 {dimension_numbers = #tpu.dot_dimension_numbers<[1], [0], [0], [1], [0, 0, 1, 1], [], []>} : vector<8x32xbf16>, vector<32x32xbf16>, vector<8x32xf32> -> vector<8x32xf32>
    %119 = vector.extract_strided_slice %90 {offsets = [32, 0], sizes = [8, 32], strides = [1, 1]} : vector<64x32xf32> to vector<8x32xf32>
    %120 = arith.addf %118, %119 : vector<8x32xf32>
    %121 = math.tanh %120 : vector<8x32xf32>
    %122 = arith.truncf %121 : vector<8x32xf32> to vector<8x32xbf16>
    %cst_52 = arith.constant dense<0.000000e+00> : vector<8x32xf32>
    %123 = tpu.matmul %122, %99, %cst_52 {dimension_numbers = #tpu.dot_dimension_numbers<[1], [0], [0], [1], [0, 0, 1, 1], [], []>} : vector<8x32xbf16>, vector<32x32xbf16>, vector<8x32xf32> -> vector<8x32xf32>
    %124 = vector.extract_strided_slice %90 {offsets = [40, 0], sizes = [8, 32], strides = [1, 1]} : vector<64x32xf32> to vector<8x32xf32>
    %125 = arith.addf %123, %124 : vector<8x32xf32>
    %126 = math.tanh %125 : vector<8x32xf32>
    %127 = arith.truncf %126 : vector<8x32xf32> to vector<8x32xbf16>
    %cst_53 = arith.constant dense<0.000000e+00> : vector<8x32xf32>
    %128 = tpu.matmul %127, %99, %cst_53 {dimension_numbers = #tpu.dot_dimension_numbers<[1], [0], [0], [1], [0, 0, 1, 1], [], []>} : vector<8x32xbf16>, vector<32x32xbf16>, vector<8x32xf32> -> vector<8x32xf32>
    %129 = vector.extract_strided_slice %90 {offsets = [48, 0], sizes = [8, 32], strides = [1, 1]} : vector<64x32xf32> to vector<8x32xf32>
    %130 = arith.addf %128, %129 : vector<8x32xf32>
    %131 = math.tanh %130 : vector<8x32xf32>
    %132 = arith.truncf %131 : vector<8x32xf32> to vector<8x32xbf16>
    %cst_54 = arith.constant dense<0.000000e+00> : vector<8x32xf32>
    %133 = tpu.matmul %132, %99, %cst_54 {dimension_numbers = #tpu.dot_dimension_numbers<[1], [0], [0], [1], [0, 0, 1, 1], [], []>} : vector<8x32xbf16>, vector<32x32xbf16>, vector<8x32xf32> -> vector<8x32xf32>
    %134 = vector.extract_strided_slice %90 {offsets = [56, 0], sizes = [8, 32], strides = [1, 1]} : vector<64x32xf32> to vector<8x32xf32>
    %135 = arith.addf %133, %134 : vector<8x32xf32>
    %136 = math.tanh %135 : vector<8x32xf32>
    %137 = tpu.concatenate %136, %97 in 1 : vector<8x32xf32>, vector<8x32xf32> -> vector<8x64xf32>
    %138 = arith.mulf %137, %137 : vector<8x64xf32>
    %cst_55 = arith.constant dense<0.000000e+00> : vector<8xf32>
    %139 = vector.multi_reduction <add>, %138, %cst_55 [1] : vector<8x64xf32> to vector<8xf32>
    %140 = vector.shape_cast %139 : vector<8xf32> to vector<8x1xf32>
    %cst_56 = arith.constant 1.000000e+00 : f32
    %141 = vector.broadcast %cst_56 : f32 to vector<8x1xf32>
    %142 = arith.cmpf ogt, %140, %141 : vector<8x1xf32>
    %143 = math.rsqrt %140 : vector<8x1xf32>
    %cst_57 = arith.constant 1.000000e+00 : f32
    %144 = vector.broadcast %cst_57 : f32 to vector<8x1xf32>
    %145 = arith.select %142, %143, %144 : vector<8x1xi1>, vector<8x1xf32>
    %146 = vector.broadcast %145 : vector<8x1xf32> to vector<8x64xf32>
    %147 = arith.mulf %137, %146 : vector<8x64xf32>
    %148 = vector.extract_strided_slice %147 {offsets = [0, 0], sizes = [2, 64], strides = [1, 1]} : vector<8x64xf32> to vector<2x64xf32>
    %149 = vector.extract_strided_slice %147 {offsets = [2, 0], sizes = [2, 64], strides = [1, 1]} : vector<8x64xf32> to vector<2x64xf32>
    %cst_58 = arith.constant dense<0.000000e+00> : vector<64xf32>
    %150 = vector.multi_reduction <add>, %148, %cst_58 [0] : vector<2x64xf32> to vector<64xf32>
    %151 = vector.shape_cast %150 : vector<64xf32> to vector<1x64xf32>
    %cst_59 = arith.constant 2.000000e+00 : f32
    %152 = vector.broadcast %cst_59 : f32 to vector<1x64xf32>
    %153 = arith.divf %151, %152 : vector<1x64xf32>
    %154 = arith.mulf %153, %153 : vector<1x64xf32>
    %155 = vector.shape_cast %154 : vector<1x64xf32> to vector<1x1x64xf32>
    %cst_60 = arith.constant dense<0.000000e+00> : vector<1xf32>
    %156 = vector.multi_reduction <add>, %155, %cst_60 [1, 2] : vector<1x1x64xf32> to vector<1xf32>
    %157 = vector.shape_cast %156 : vector<1xf32> to vector<1x1x1xf32>
    %158 = vector.extract %157[0, 0, 0] : f32 from vector<1x1x1xf32>
    %159 = math.rsqrt %158 : f32
    %160 = vector.broadcast %159 : f32 to vector<1x64xf32>
    %161 = arith.mulf %153, %160 : vector<1x64xf32>
    %162 = vector.broadcast %161 : vector<1x64xf32> to vector<2x64xf32>
    %163 = arith.mulf %148, %162 : vector<2x64xf32>
    %cst_61 = arith.constant dense<0.000000e+00> : vector<2xf32>
    %164 = vector.multi_reduction <add>, %163, %cst_61 [1] : vector<2x64xf32> to vector<2xf32>
    %165 = vector.shape_cast %164 : vector<2xf32> to vector<2x1xf32>
    %166 = vector.broadcast %161 : vector<1x64xf32> to vector<2x64xf32>
    %167 = arith.mulf %149, %166 : vector<2x64xf32>
    %cst_62 = arith.constant dense<0.000000e+00> : vector<2xf32>
    %168 = vector.multi_reduction <add>, %167, %cst_62 [1] : vector<2x64xf32> to vector<2xf32>
    %169 = vector.shape_cast %168 : vector<2xf32> to vector<2x1xf32>
    %170 = vector.shape_cast %165 : vector<2x1xf32> to vector<1x2x1xf32>
    %cst_63 = arith.constant dense<0.000000e+00> : vector<1xf32>
    %171 = vector.multi_reduction <add>, %170, %cst_63 [1, 2] : vector<1x2x1xf32> to vector<1xf32>
    %172 = vector.shape_cast %171 : vector<1xf32> to vector<1x1x1xf32>
    %173 = vector.extract %172[0, 0, 0] : f32 from vector<1x1x1xf32>
    %cst_64 = arith.constant 2.000000e+00 : f32
    %174 = arith.divf %173, %cst_64 : f32
    %cst_65 = arith.constant 1.000000e+00 : f32
    %175 = arith.subf %cst_65, %174 : f32
    %cst_66 = arith.constant 0.699999988 : f32
    %176 = vector.broadcast %cst_66 : f32 to vector<2x1xf32>
    %177 = arith.maximumf %176, %169 : vector<2x1xf32>
    %178 = vector.shape_cast %177 : vector<2x1xf32> to vector<1x2x1xf32>
    %cst_67 = arith.constant dense<0.000000e+00> : vector<1xf32>
    %179 = vector.multi_reduction <add>, %178, %cst_67 [1, 2] : vector<1x2x1xf32> to vector<1xf32>
    %180 = vector.shape_cast %179 : vector<1xf32> to vector<1x1x1xf32>
    %181 = vector.extract %180[0, 0, 0] : f32 from vector<1x1x1xf32>
    %cst_68 = arith.constant 2.000000e+00 : f32
    %182 = arith.divf %181, %cst_68 : f32
    %cst_69 = arith.constant -0.699999988 : f32
    %183 = arith.addf %cst_69, %182 : f32
    %184 = vector.broadcast %175 : f32 to vector<1x1xf32>
    %185 = vector.broadcast %183 : f32 to vector<1x1xf32>
    %186 = tpu.concatenate %184, %185 in 1 : vector<1x1xf32>, vector<1x1xf32> -> vector<1x2xf32>
    %c0_70 = arith.constant 0 : index
    %c0_71 = arith.constant 0 : index
    %187 = vector.load %arg3[%c0_70, %c0_71] : memref<1x2xf32, #tpu.memory_space<vmem>>, vector<1x2xf32>
    tpu.vector_store %arg3[%c0_70, %c0_71], %186 {strides = array<i32>} : memref<1x2xf32, #tpu.memory_space<vmem>>, vector<1x2xf32>,
    return
  }
}

</mosaic_0001>

<llo_original>
// kernel: style_disperser_forward.1
$region0: #{style_disperser_forward.1}
  #allocation0 [shape = 'u32[]', space=smem, size = 0x4, offset = 0x4, fixed_abs, tag = 'smem constant byte address 0x4 - core index']
  #allocation1 [shape = 'u32[144,128]{1,0:T(1,128)}', space=vmem, size = 0x12000, scoped, tag = 'internal scratch']
  #allocation2 [shape = 'f32[64,64]{1,0:T(8,128)}', space=vmem, size = 0x8000, scoped, tag = 'scratch operand']
  %s0 = inlined_call_operand.vmem [shape: s32[128,1], index: 0, kind: input, shape index: {}]
  %s1 = inlined_call_operand.vmem [shape: f32[97,64], index: 1, kind: input, shape index: {}]
  %s2 = inlined_call_operand.vmem [shape: f32[169,32], index: 2, kind: input, shape index: {}]
  %s3 = inlined_call_operand.vmem [shape: f32[1,2], index: 3, kind: output, shape index: {}]
  %s4 = sld [smem:[#allocation0]]
  $region22: #{style_disperser_forward.1} parent=0
    _
  %s6 = ssub.s32 1, %s4
  %s7 = scalar_select 0, %s6, %s4
  // Predicated region
  $region2: #{style_disperser_forward.1} parent=0 // pred_check
    _
  $region3: #{style_disperser_forward.1} parent=0 // pred_check_branch
    %9 = sbr.rel (0) target = $region5
  $region4: #{style_disperser_forward.1} parent=0 // pred_region
    _
  $region5: #{style_disperser_forward.1} parent=0 // pred_fallthru
    _
  // Predicated region
  $region6: #{style_disperser_forward.1} parent=0 // pred_check
    _
  $region7: #{style_disperser_forward.1} parent=0 // pred_check_branch
    %11 = sbr.rel (0) target = $region9
  $region8: #{style_disperser_forward.1} parent=0 // pred_region
    _
  $region9: #{style_disperser_forward.1} parent=0 // pred_fallthru
    _
  // Predicated region
  $region10: #{style_disperser_forward.1} parent=0 // pred_check
    _
  $region11: #{style_disperser_forward.1} parent=0 // pred_check_branch
    %13 = sbr.rel (0) target = $region13
  $region12: #{style_disperser_forward.1} parent=0 // pred_region
    _
  $region13: #{style_disperser_forward.1} parent=0 // pred_fallthru
    _
  %v15 = vld [vmem:[%s0] sm:$0xff]
  %v16 = vld [vmem:[%s0 + $0x8] sm:$0xff]
  %v17 = vld [vmem:[%s0 + $0x10] sm:$0xff]
  %v18 = vld [vmem:[%s0 + $0x18] sm:$0xff]
  %v19 = vld [vmem:[%s0 + $0x20] sm:$0xff]
  %v20 = vld [vmem:[%s0 + $0x28] sm:$0xff]
  %v21 = vld [vmem:[%s0 + $0x30] sm:$0xff]
  %v22 = vld [vmem:[%s0 + $0x38] sm:$0xff]
  %v23 = vld [vmem:[%s0 + $0x40] sm:$0xff]
  %v24 = vld [vmem:[%s0 + $0x48] sm:$0xff]
  %v25 = vld [vmem:[%s0 + $0x50] sm:$0xff]
  %v26 = vld [vmem:[%s0 + $0x58] sm:$0xff]
  %v27 = vld [vmem:[%s0 + $0x60] sm:$0xff]
  %v28 = vld [vmem:[%s0 + $0x68] sm:$0xff]
  %v29 = vld [vmem:[%s0 + $0x70] sm:$0xff]
  %v30 = vld [vmem:[%s0 + $0x78] sm:$0xff]
  %v31 = vlaneseq
  %v32 = vand.u32 %v31, 127
  %33 = vset.pattern.permute.xlu0 0
  %34 = vperm.xlu0 %33, %v15
  %v35 = vpop.permute.xlu0 %34
  %36 = vset.pattern.permute.xlu0 0
  %37 = vperm.xlu0 %36, %v16
  %v38 = vpop.permute.xlu0 %37
  %39 = vset.pattern.permute.xlu0 0
  %40 = vperm.xlu0 %39, %v17
  %v41 = vpop.permute.xlu0 %40
  %42 = vset.pattern.permute.xlu0 0
  %43 = vperm.xlu0 %42, %v18
  %v44 = vpop.permute.xlu0 %43
  %45 = vset.pattern.permute.xlu0 0
  %46 = vperm.xlu0 %45, %v19
  %v47 = vpop.permute.xlu0 %46
  %48 = vset.pattern.permute.xlu0 0
  %49 = vperm.xlu0 %48, %v20
  %v50 = vpop.permute.xlu0 %49
  %51 = vset.pattern.permute.xlu0 0
  %52 = vperm.xlu0 %51, %v21
  %v53 = vpop.permute.xlu0 %52
  %54 = vset.pattern.permute.xlu0 0
  %55 = vperm.xlu0 %54, %v22
  %v56 = vpop.permute.xlu0 %55
  %57 = vset.pattern.permute.xlu0 0
  %58 = vperm.xlu0 %57, %v23
  %v59 = vpop.permute.xlu0 %58
  %60 = vset.pattern.permute.xlu0 0
  %61 = vperm.xlu0 %60, %v24
  %v62 = vpop.permute.xlu0 %61
  %63 = vset.pattern.permute.xlu0 0
  %64 = vperm.xlu0 %63, %v25
  %v65 = vpop.permute.xlu0 %64
  %66 = vset.pattern.permute.xlu0 0
  %67 = vperm.xlu0 %66, %v26
  %v68 = vpop.permute.xlu0 %67
  %69 = vset.pattern.permute.xlu0 0
  %70 = vperm.xlu0 %69, %v27
  %v71 = vpop.permute.xlu0 %70
  %72 = vset.pattern.permute.xlu0 0
  %73 = vperm.xlu0 %72, %v28
  %v74 = vpop.permute.xlu0 %73
  %75 = vset.pattern.permute.xlu0 0
  %76 = vperm.xlu0 %75, %v29
  %v77 = vpop.permute.xlu0 %76
  %78 = vset.pattern.permute.xlu0 0
  %79 = vperm.xlu0 %78, %v30
  %v80 = vpop.permute.xlu0 %79
  %vm81 = vcmp.eq.s32.totalorder %v35, %v32
  %vm82 = vcmp.eq.s32.totalorder %v38, %v32
  %vm83 = vcmp.eq.s32.totalorder %v41, %v32
  %vm84 = vcmp.eq.s32.totalorder %v44, %v32
  %vm85 = vcmp.eq.s32.totalorder %v47, %v32
  %vm86 = vcmp.eq.s32.totalorder %v50, %v32
  %vm87 = vcmp.eq.s32.totalorder %v53, %v32
  %vm88 = vcmp.eq.s32.totalorder %v56, %v32
  %vm89 = vcmp.eq.s32.totalorder %v59, %v32
  %vm90 = vcmp.eq.s32.totalorder %v62, %v32
  %vm91 = vcmp.eq.s32.totalorder %v65, %v32
  %vm92 = vcmp.eq.s32.totalorder %v68, %v32
  %vm93 = vcmp.eq.s32.totalorder %v71, %v32
  %vm94 = vcmp.eq.s32.totalorder %v74, %v32
  %vm95 = vcmp.eq.s32.totalorder %v77, %v32
  %vm96 = vcmp.eq.s32.totalorder %v80, %v32
  %v97 = vsel %vm81, 1, 0
  %v98 = vsel %vm82, 1, 0
  %v99 = vsel %vm83, 1, 0
  %v100 = vsel %vm84, 1, 0
  %v101 = vsel %vm85, 1, 0
  %v102 = vsel %vm86, 1, 0
  %v103 = vsel %vm87, 1, 0
  %v104 = vsel %vm88, 1, 0
  %v105 = vsel %vm89, 1, 0
  %v106 = vsel %vm90, 1, 0
  %v107 = vsel %vm91, 1, 0
  %v108 = vsel %vm92, 1, 0
  %v109 = vsel %vm93, 1, 0
  %v110 = vsel %vm94, 1, 0
  %v111 = vsel %vm95, 1, 0
  %v112 = vsel %vm96, 1, 0
  %v113 = vcvt.s32.f32 %v97
  %v114 = vcvt.s32.f32 %v98
  %v115 = vcvt.s32.f32 %v99
  %v116 = vcvt.s32.f32 %v100
  %v117 = vcvt.s32.f32 %v101
  %v118 = vcvt.s32.f32 %v102
  %v119 = vcvt.s32.f32 %v103
  %v120 = vcvt.s32.f32 %v104
  %v121 = vcvt.s32.f32 %v105
  %v122 = vcvt.s32.f32 %v106
  %v123 = vcvt.s32.f32 %v107
  %v124 = vcvt.s32.f32 %v108
  %v125 = vcvt.s32.f32 %v109
  %v126 = vcvt.s32.f32 %v110
  %v127 = vcvt.s32.f32 %v111
  %v128 = vcvt.s32.f32 %v112
  %v129 = vld [vmem:[%s1] sm:$0xff]
  %v130 = vld [vmem:[%s1 + $0x8] sm:$0xff]
  %v131 = vld [vmem:[%s1 + $0x10] sm:$0xff]
  %v132 = vld [vmem:[%s1 + $0x18] sm:$0xff]
  %vm133 = vcmask 261120
  %v135 = vsel %vm133, %v113, 0
  %v138 = vsel %vm133, %v114, 0
  %v141 = vsel %vm133, %v115, 0
  %v144 = vsel %vm133, %v116, 0
  %v147 = vsel %vm133, %v117, 0
  %v150 = vsel %vm133, %v118, 0
  %v153 = vsel %vm133, %v119, 0
  %v156 = vsel %vm133, %v120, 0
  %v159 = vsel %vm133, %v121, 0
  %v162 = vsel %vm133, %v122, 0
  %v165 = vsel %vm133, %v123, 0
  %v168 = vsel %vm133, %v124, 0
  %v171 = vsel %vm133, %v125, 0
  %v174 = vsel %vm133, %v126, 0
  %v177 = vsel %vm133, %v127, 0
  %v180 = vsel %vm133, %v128, 0
  %182 = vmatprep.subr.mxu0 0.0
  %183 = vmatpush1.msra.mxu0 %v129
  %184 = vmatprep.subr.mxu0 0.0
  %185 = vmatpush1.msra.mxu0 %v130
  %186 = vmatprep.subr.mxu0 0.0
  %187 = vmatpush1.msra.mxu0 %v131
  %188 = vmatprep.subr.mxu0 0.0
  %189 = vmatpush1.msra.mxu0 %v132
  %190 = vmatprep.subr.mxu0 0.0
  %191 = vmatpush1.msra.mxu0 0.0
  %192 = vmatprep.subr.mxu0 0.0
  %193 = vmatpush1.msra.mxu0 0.0
  %194 = vmatprep.subr.mxu0 0.0
  %195 = vmatpush1.msra.mxu0 0.0
  %196 = vmatprep.subr.mxu0 0.0
  %197 = vmatpush1.msra.mxu0 0.0
  %198 = vmatprep.subr.mxu0 0.0
  %199 = vmatpush1.msra.mxu0 0.0
  %200 = vmatprep.subr.mxu0 0.0
  %201 = vmatpush1.msra.mxu0 0.0
  %202 = vmatprep.subr.mxu0 0.0
  %203 = vmatpush1.msra.mxu0 0.0
  %204 = vmatprep.subr.mxu0 0.0
  %205 = vmatpush1.msra.mxu0 0.0
  %206 = vmatprep.subr.mxu0 0.0
  %207 = vmatpush1.msra.mxu0 0.0
  %208 = vmatprep.subr.mxu0 0.0
  %209 = vmatpush1.msra.mxu0 0.0
  %210 = vmatprep.subr.mxu0 0.0
  %211 = vmatpush1.msra.mxu0 0.0
  %212 = vmatprep.subr.mxu0 0.0
  %213 = vmatpush1.msra.mxu0 0.0
  %214 = vmatprep.subr.mxu0 0.0
  %215 = vmatpush1.msra.mxu0 0.0
  %216 = vmatprep.subr.mxu0 0.0
  %217 = vmatpush1.msra.mxu0 0.0
  %218 = vmatprep.subr.mxu0 0.0
  %219 = vmatpush1.msra.mxu0 0.0
  %220 = vmatprep.subr.mxu0 0.0
  %221 = vmatpush1.msra.mxu0 0.0
  %222 = vmatprep.subr.mxu0 0.0
  %223 = vmatpush1.msra.mxu0 0.0
  %224 = vmatprep.subr.mxu0 0.0
  %225 = vmatpush1.msra.mxu0 0.0
  %226 = vmatprep.subr.mxu0 0.0
  %227 = vmatpush1.msra.mxu0 0.0
  %228 = vmatprep.subr.mxu0 0.0
  %229 = vmatpush1.msra.mxu0 0.0
  %230 = vmatprep.subr.mxu0 0.0
  %231 = vmatpush1.msra.mxu0 0.0
  %232 = vmatprep.subr.mxu0 0.0
  %233 = vmatpush1.msra.mxu0 0.0
  %234 = vmatprep.subr.mxu0 0.0
  %235 = vmatpush1.msra.mxu0 0.0
  %236 = vmatprep.subr.mxu0 0.0
  %237 = vmatpush1.msra.mxu0 0.0
  %238 = vmatprep.subr.mxu0 0.0
  %239 = vmatpush1.msra.mxu0 0.0
  %240 = vmatprep.subr.mxu0 0.0
  %241 = vmatpush1.msra.mxu0 0.0
  %242 = vmatprep.subr.mxu0 0.0
  %243 = vmatpush1.msra.mxu0 0.0
  %244 = vmatprep.subr.mxu0 0.0
  %245 = vmatpush1.msra.mxu0 0.0
  %246 = vmatprep.mubr.f32.mxu0 0.0
  %247 = vmatmul.mubr.f32.gmra.mrb[0].mxu0 %v135
  %v248 = vpop.f32.mrb[0].mxu0
  %v249 = vadd.f32 0.0, %v248
  %v250 = vpop.f32.mrb[0].mxu0
  %251 = vmatprep.mubr.f32.mxu0 0.0
  %252 = vmatmul.mubr.f32.gmra.mrb[0].mxu0 %v138
  %v253 = vpop.f32.mrb[0].mxu0
  %v254 = vadd.f32 0.0, %v253
  %v255 = vpop.f32.mrb[0].mxu0
  %256 = vmatprep.mubr.f32.mxu0 0.0
  %257 = vmatmul.mubr.f32.gmra.mrb[0].mxu0 %v141
  %v258 = vpop.f32.mrb[0].mxu0
  %v259 = vadd.f32 0.0, %v258
  %v260 = vpop.f32.mrb[0].mxu0
  %261 = vmatprep.mubr.f32.mxu0 0.0
  %262 = vmatmul.mubr.f32.gmra.mrb[0].mxu0 %v144
  %v263 = vpop.f32.mrb[0].mxu0
  %v264 = vadd.f32 0.0, %v263
  %v265 = vpop.f32.mrb[0].mxu0
  %266 = vmatprep.mubr.f32.mxu0 0.0
  %267 = vmatmul.mubr.f32.gmra.mrb[0].mxu0 %v147
  %v268 = vpop.f32.mrb[0].mxu0
  %v269 = vadd.f32 0.0, %v268
  %v270 = vpop.f32.mrb[0].mxu0
  %271 = vmatprep.mubr.f32.mxu0 0.0
  %272 = vmatmul.mubr.f32.gmra.mrb[0].mxu0 %v150
  %v273 = vpop.f32.mrb[0].mxu0
  %v274 = vadd.f32 0.0, %v273
  %v275 = vpop.f32.mrb[0].mxu0
  %276 = vmatprep.mubr.f32.mxu0 0.0
  %277 = vmatmul.mubr.f32.gmra.mrb[0].mxu0 %v153
  %v278 = vpop.f32.mrb[0].mxu0
  %v279 = vadd.f32 0.0, %v278
  %v280 = vpop.f32.mrb[0].mxu0
  %281 = vmatprep.mubr.f32.mxu0 0.0
  %282 = vmatmul.mubr.f32.gmra.mrb[0].mxu0 %v156
  %v283 = vpop.f32.mrb[0].mxu0
  %v284 = vadd.f32 0.0, %v283
  %v285 = vpop.f32.mrb[0].mxu0
  %286 = vmatprep.mubr.f32.mxu0 0.0
  %287 = vmatmul.mubr.f32.gmra.mrb[0].mxu0 %v159
  %v288 = vpop.f32.mrb[0].mxu0
  %v289 = vadd.f32 0.0, %v288
  %v290 = vpop.f32.mrb[0].mxu0
  %291 = vmatprep.mubr.f32.mxu0 0.0
  %292 = vmatmul.mubr.f32.gmra.mrb[0].mxu0 %v162
  %v293 = vpop.f32.mrb[0].mxu0
  %v294 = vadd.f32 0.0, %v293
  %v295 = vpop.f32.mrb[0].mxu0
  %296 = vmatprep.mubr.f32.mxu0 0.0
  %297 = vmatmul.mubr.f32.gmra.mrb[0].mxu0 %v165
  %v298 = vpop.f32.mrb[0].mxu0
  %v299 = vadd.f32 0.0, %v298
  %v300 = vpop.f32.mrb[0].mxu0
  %301 = vmatprep.mubr.f32.mxu0 0.0
  %302 = vmatmul.mubr.f32.gmra.mrb[0].mxu0 %v168
  %v303 = vpop.f32.mrb[0].mxu0
  %v304 = vadd.f32 0.0, %v303
  %v305 = vpop.f32.mrb[0].mxu0
  %306 = vmatprep.mubr.f32.mxu0 0.0
  %307 = vmatmul.mubr.f32.gmra.mrb[0].mxu0 %v171
  %v308 = vpop.f32.mrb[0].mxu0
  %v309 = vadd.f32 0.0, %v308
  %v310 = vpop.f32.mrb[0].mxu0
  %311 = vmatprep.mubr.f32.mxu0 0.0
  %312 = vmatmul.mubr.f32.gmra.mrb[0].mxu0 %v174
  %v313 = vpop.f32.mrb[0].mxu0
  %v314 = vadd.f32 0.0, %v313
  %v315 = vpop.f32.mrb[0].mxu0
  %316 = vmatprep.mubr.f32.mxu0 0.0
  %317 = vmatmul.mubr.f32.gmra.mrb[0].mxu0 %v177
  %v318 = vpop.f32.mrb[0].mxu0
  %v319 = vadd.f32 0.0, %v318
  %v320 = vpop.f32.mrb[0].mxu0
  %321 = vmatprep.mubr.f32.mxu0 0.0
  %322 = vmatmul.mubr.f32.gmra.mrb[0].mxu0 %v180
  %v323 = vpop.f32.mrb[0].mxu0
  %v324 = vadd.f32 0.0, %v323
  %v325 = vpop.f32.mrb[0].mxu0
  %326 = vdwg.mxu0
  %v327 = vld [vmem:[%s1 + $0x60] sm:$0x1]
  %v328 = vadd.f32 %v249, %v289
  %v329 = vadd.f32 %v254, %v294
  %v330 = vadd.f32 %v259, %v299
  %v331 = vadd.f32 %v264, %v304
  %v332 = vadd.f32 %v269, %v309
  %v333 = vadd.f32 %v274, %v314
  %v334 = vadd.f32 %v279, %v319
  %v335 = vadd.f32 %v284, %v324
  %v336 = vlaneseq
  %v337 = vshrl.u32 %v336, 7
  %v338 = vsub.s32 0, %v337
  %v339 = vrot.slane %v327, %v338
  %v340 = vadd.f32 %v328, %v339
  %v341 = vadd.f32 %v329, %v339
  %v342 = vadd.f32 %v330, %v339
  %v343 = vadd.f32 %v331, %v339
  %v344 = vadd.f32 %v332, %v339
  %v345 = vadd.f32 %v333, %v339
  %v346 = vadd.f32 %v334, %v339
  %v347 = vadd.f32 %v335, %v339
  %v348 = vld [vmem:[%s1 + $0x20] sm:$0xff]
  %v349 = vld [vmem:[%s1 + $0x28] sm:$0xff]
  %v350 = vld [vmem:[%s1 + $0x30] sm:$0xff]
  %v351 = vld [vmem:[%s1 + $0x38] sm:$0xff]
  %v352 = vld [vmem:[%s1 + $0x40] sm:$0xff]
  %v353 = vld [vmem:[%s1 + $0x48] sm:$0xff]
  %v354 = vld [vmem:[%s1 + $0x50] sm:$0xff]
  %v355 = vld [vmem:[%s1 + $0x58] sm:$0xff]
  %v356 = vpack.c.bf16 %v349, %v348
  %v357 = vpack.c.bf16 %v351, %v350
  %v358 = vpack.c.bf16 %v353, %v352
  %v359 = vpack.c.bf16 %v355, %v354
  %v360 = vtanh.pop %v340
  %361 = vst.msk [vmem:[#allocation2] sm:$0xff] %vm133, %v360
  %vm362 = vcmask 523520
  %363 = vst.msk [vmem:[#allocation2 + $0x38] sm:$0xff] %vm362, %v360
  %v364 = vpack.c.bf16 %v360, %v360
  %vm365 = vcmask 523264
  %v367 = vsel %vm365, %v364, 0
  %369 = vmatprep.subr.bf16.mxu0 0
  %370 = vmatpush1.bf16.msra.mxu0 %v356
  %371 = vmatprep.subr.bf16.mxu0 0
  %372 = vmatpush1.bf16.msra.mxu0 %v357
  %373 = vmatprep.subr.bf16.mxu0 0
  %374 = vmatpush1.bf16.msra.mxu0 %v358
  %375 = vmatprep.subr.bf16.mxu0 0
  %376 = vmatpush1.bf16.msra.mxu0 %v359
  %377 = vmatprep.subr.bf16.mxu0 0
  %378 = vmatpush1.bf16.msra.mxu0 0
  %379 = vmatprep.subr.bf16.mxu0 0
  %380 = vmatpush1.bf16.msra.mxu0 0
  %381 = vmatprep.subr.bf16.mxu0 0
  %382 = vmatpush1.bf16.msra.mxu0 0
  %383 = vmatprep.subr.bf16.mxu0 0
  %384 = vmatpush1.bf16.msra.mxu0 0
  %385 = vmatprep.subr.bf16.mxu0 0
  %386 = vmatpush1.bf16.msra.mxu0 0
  %387 = vmatprep.subr.bf16.mxu0 0
  %388 = vmatpush1.bf16.msra.mxu0 0
  %389 = vmatprep.subr.bf16.mxu0 0
  %390 = vmatpush1.bf16.msra.mxu0 0
  %391 = vmatprep.subr.bf16.mxu0 0
  %392 = vmatpush1.bf16.msra.mxu0 0
  %393 = vmatprep.subr.bf16.mxu0 0
  %394 = vmatpush1.bf16.msra.mxu0 0
  %395 = vmatprep.subr.bf16.mxu0 0
  %396 = vmatpush1.bf16.msra.mxu0 0
  %397 = vmatprep.subr.bf16.mxu0 0
  %398 = vmatpush1.bf16.msra.mxu0 0
  %399 = vmatprep.subr.bf16.mxu0 0
  %400 = vmatpush1.bf16.msra.mxu0 0
  %401 = vmatprep.mubr.bf16.mxu0 0
  %402 = vmatmul.mubr.bf16.gmra.mrb[0].mxu0 %v367
  %v403 = vpop.f32.mrb[0].mxu0
  %v404 = vadd.f32 %v341, %v403
  %v405 = vpop.f32.mrb[0].mxu0
  %v406 = vpop.f32.mrb[0].mxu0
  %v407 = vpop.f32.mrb[0].mxu0
  %408 = vdwg.mxu0
  %v409 = vtanh.pop %v404
  %410 = vst.msk [vmem:[#allocation2 + $0x8] sm:$0xff] %vm133, %v409
  %411 = vst.msk [vmem:[#allocation2 + $0x30] sm:$0xff] %vm362, %v409
  %v412 = vpack.c.bf16 %v409, %v409
  %v414 = vsel %vm365, %v412, 0
  %416 = vmatprep.subr.bf16.mxu0 0
  %417 = vmatpush1.bf16.msra.mxu0 %v356
  %418 = vmatprep.subr.bf16.mxu0 0
  %419 = vmatpush1.bf16.msra.mxu0 %v357
  %420 = vmatprep.subr.bf16.mxu0 0
  %421 = vmatpush1.bf16.msra.mxu0 %v358
  %422 = vmatprep.subr.bf16.mxu0 0
  %423 = vmatpush1.bf16.msra.mxu0 %v359
  %424 = vmatprep.subr.bf16.mxu0 0
  %425 = vmatpush1.bf16.msra.mxu0 0
  %426 = vmatprep.subr.bf16.mxu0 0
  %427 = vmatpush1.bf16.msra.mxu0 0
  %428 = vmatprep.subr.bf16.mxu0 0
  %429 = vmatpush1.bf16.msra.mxu0 0
  %430 = vmatprep.subr.bf16.mxu0 0
  %431 = vmatpush1.bf16.msra.mxu0 0
  %432 = vmatprep.subr.bf16.mxu0 0
  %433 = vmatpush1.bf16.msra.mxu0 0
  %434 = vmatprep.subr.bf16.mxu0 0
  %435 = vmatpush1.bf16.msra.mxu0 0
  %436 = vmatprep.subr.bf16.mxu0 0
  %437 = vmatpush1.bf16.msra.mxu0 0
  %438 = vmatprep.subr.bf16.mxu0 0
  %439 = vmatpush1.bf16.msra.mxu0 0
  %440 = vmatprep.subr.bf16.mxu0 0
  %441 = vmatpush1.bf16.msra.mxu0 0
  %442 = vmatprep.subr.bf16.mxu0 0
  %443 = vmatpush1.bf16.msra.mxu0 0
  %444 = vmatprep.subr.bf16.mxu0 0
  %445 = vmatpush1.bf16.msra.mxu0 0
  %446 = vmatprep.subr.bf16.mxu0 0
  %447 = vmatpush1.bf16.msra.mxu0 0
  %448 = vmatprep.mubr.bf16.mxu0 0
  %449 = vmatmul.mubr.bf16.gmra.mrb[0].mxu0 %v414
  %v450 = vpop.f32.mrb[0].mxu0
  %v451 = vadd.f32 %v342, %v450
  %v452 = vpop.f32.mrb[0].mxu0
  %v453 = vpop.f32.mrb[0].mxu0
  %v454 = vpop.f32.mrb[0].mxu0
  %455 = vdwg.mxu0
  %v456 = vtanh.pop %v451
  %457 = vst.msk [vmem:[#allocation2 + $0x10] sm:$0xff] %vm133, %v456
  %458 = vst.msk [vmem:[#allocation2 + $0x28] sm:$0xff] %vm362, %v456
  %v459 = vpack.c.bf16 %v456, %v456
  %v461 = vsel %vm365, %v459, 0
  %463 = vmatprep.subr.bf16.mxu0 0
  %464 = vmatpush1.bf16.msra.mxu0 %v356
  %465 = vmatprep.subr.bf16.mxu0 0
  %466 = vmatpush1.bf16.msra.mxu0 %v357
  %467 = vmatprep.subr.bf16.mxu0 0
  %468 = vmatpush1.bf16.msra.mxu0 %v358
  %469 = vmatprep.subr.bf16.mxu0 0
  %470 = vmatpush1.bf16.msra.mxu0 %v359
  %471 = vmatprep.subr.bf16.mxu0 0
  %472 = vmatpush1.bf16.msra.mxu0 0
  %473 = vmatprep.subr.bf16.mxu0 0
  %474 = vmatpush1.bf16.msra.mxu0 0
  %475 = vmatprep.subr.bf16.mxu0 0
  %476 = vmatpush1.bf16.msra.mxu0 0
  %477 = vmatprep.subr.bf16.mxu0 0
  %478 = vmatpush1.bf16.msra.mxu0 0
  %479 = vmatprep.subr.bf16.mxu0 0
  %480 = vmatpush1.bf16.msra.mxu0 0
  %481 = vmatprep.subr.bf16.mxu0 0
  %482 = vmatpush1.bf16.msra.mxu0 0
  %483 = vmatprep.subr.bf16.mxu0 0
  %484 = vmatpush1.bf16.msra.mxu0 0
  %485 = vmatprep.subr.bf16.mxu0 0
  %486 = vmatpush1.bf16.msra.mxu0 0
  %487 = vmatprep.subr.bf16.mxu0 0
  %488 = vmatpush1.bf16.msra.mxu0 0
  %489 = vmatprep.subr.bf16.mxu0 0
  %490 = vmatpush1.bf16.msra.mxu0 0
  %491 = vmatprep.subr.bf16.mxu0 0
  %492 = vmatpush1.bf16.msra.mxu0 0
  %493 = vmatprep.subr.bf16.mxu0 0
  %494 = vmatpush1.bf16.msra.mxu0 0
  %495 = vmatprep.mubr.bf16.mxu0 0
  %496 = vmatmul.mubr.bf16.gmra.mrb[0].mxu0 %v461
  %v497 = vpop.f32.mrb[0].mxu0
  %v498 = vadd.f32 %v343, %v497
  %v499 = vpop.f32.mrb[0].mxu0
  %v500 = vpop.f32.mrb[0].mxu0
  %v501 = vpop.f32.mrb[0].mxu0
  %502 = vdwg.mxu0
  %v503 = vtanh.pop %v498
  %504 = vst.msk [vmem:[#allocation2 + $0x18] sm:$0xff] %vm133, %v503
  %505 = vst.msk [vmem:[#allocation2 + $0x20] sm:$0xff] %vm362, %v503
  %v506 = vpack.c.bf16 %v503, %v503
  %v508 = vsel %vm365, %v506, 0
  %510 = vmatprep.subr.bf16.mxu0 0
  %511 = vmatpush1.bf16.msra.mxu0 %v356
  %512 = vmatprep.subr.bf16.mxu0 0
  %513 = vmatpush1.bf16.msra.mxu0 %v357
  %514 = vmatprep.subr.bf16.mxu0 0
  %515 = vmatpush1.bf16.msra.mxu0 %v358
  %516 = vmatprep.subr.bf16.mxu0 0
  %517 = vmatpush1.bf16.msra.mxu0 %v359
  %518 = vmatprep.subr.bf16.mxu0 0
  %519 = vmatpush1.bf16.msra.mxu0 0
  %520 = vmatprep.subr.bf16.mxu0 0
  %521 = vmatpush1.bf16.msra.mxu0 0
  %522 = vmatprep.subr.bf16.mxu0 0
  %523 = vmatpush1.bf16.msra.mxu0 0
  %524 = vmatprep.subr.bf16.mxu0 0
  %525 = vmatpush1.bf16.msra.mxu0 0
  %526 = vmatprep.subr.bf16.mxu0 0
  %527 = vmatpush1.bf16.msra.mxu0 0
  %528 = vmatprep.subr.bf16.mxu0 0
  %529 = vmatpush1.bf16.msra.mxu0 0
  %530 = vmatprep.subr.bf16.mxu0 0
  %531 = vmatpush1.bf16.msra.mxu0 0
  %532 = vmatprep.subr.bf16.mxu0 0
  %533 = vmatpush1.bf16.msra.mxu0 0
  %534 = vmatprep.subr.bf16.mxu0 0
  %535 = vmatpush1.bf16.msra.mxu0 0
  %536 = vmatprep.subr.bf16.mxu0 0
  %537 = vmatpush1.bf16.msra.mxu0 0
  %538 = vmatprep.subr.bf16.mxu0 0
  %539 = vmatpush1.bf16.msra.mxu0 0
  %540 = vmatprep.subr.bf16.mxu0 0
  %541 = vmatpush1.bf16.msra.mxu0 0
  %542 = vmatprep.mubr.bf16.mxu0 0
  %543 = vmatmul.mubr.bf16.gmra.mrb[0].mxu0 %v508
  %v544 = vpop.f32.mrb[0].mxu0
  %v545 = vadd.f32 %v344, %v544
  %v546 = vpop.f32.mrb[0].mxu0
  %v547 = vpop.f32.mrb[0].mxu0
  %v548 = vpop.f32.mrb[0].mxu0
  %549 = vdwg.mxu0
  %v550 = vtanh.pop %v545
  %551 = vst.msk [vmem:[#allocation2 + $0x20] sm:$0xff] %vm133, %v550
  %552 = vst.msk [vmem:[#allocation2 + $0x18] sm:$0xff] %vm362, %v550
  %v553 = vpack.c.bf16 %v550, %v550
  %v555 = vsel %vm365, %v553, 0
  %557 = vmatprep.subr.bf16.mxu0 0
  %558 = vmatpush1.bf16.msra.mxu0 %v356
  %559 = vmatprep.subr.bf16.mxu0 0
  %560 = vmatpush1.bf16.msra.mxu0 %v357
  %561 = vmatprep.subr.bf16.mxu0 0
  %562 = vmatpush1.bf16.msra.mxu0 %v358
  %563 = vmatprep.subr.bf16.mxu0 0
  %564 = vmatpush1.bf16.msra.mxu0 %v359
  %565 = vmatprep.subr.bf16.mxu0 0
  %566 = vmatpush1.bf16.msra.mxu0 0
  %567 = vmatprep.subr.bf16.mxu0 0
  %568 = vmatpush1.bf16.msra.mxu0 0
  %569 = vmatprep.subr.bf16.mxu0 0
  %570 = vmatpush1.bf16.msra.mxu0 0
  %571 = vmatprep.subr.bf16.mxu0 0
  %572 = vmatpush1.bf16.msra.mxu0 0
  %573 = vmatprep.subr.bf16.mxu0 0
  %574 = vmatpush1.bf16.msra.mxu0 0
  %575 = vmatprep.subr.bf16.mxu0 0
  %576 = vmatpush1.bf16.msra.mxu0 0
  %577 = vmatprep.subr.bf16.mxu0 0
  %578 = vmatpush1.bf16.msra.mxu0 0
  %579 = vmatprep.subr.bf16.mxu0 0
  %580 = vmatpush1.bf16.msra.mxu0 0
  %581 = vmatprep.subr.bf16.mxu0 0
  %582 = vmatpush1.bf16.msra.mxu0 0
  %583 = vmatprep.subr.bf16.mxu0 0
  %584 = vmatpush1.bf16.msra.mxu0 0
  %585 = vmatprep.subr.bf16.mxu0 0
  %586 = vmatpush1.bf16.msra.mxu0 0
  %587 = vmatprep.subr.bf16.mxu0 0
  %588 = vmatpush1.bf16.msra.mxu0 0
  %589 = vmatprep.mubr.bf16.mxu0 0
  %590 = vmatmul.mubr.bf16.gmra.mrb[0].mxu0 %v555
  %v591 = vpop.f32.mrb[0].mxu0
  %v592 = vadd.f32 %v345, %v591
  %v593 = vpop.f32.mrb[0].mxu0
  %v594 = vpop.f32.mrb[0].mxu0
  %v595 = vpop.f32.mrb[0].mxu0
  %596 = vdwg.mxu0
  %v597 = vtanh.pop %v592
  %598 = vst.msk [vmem:[#allocation2 + $0x28] sm:$0xff] %vm133, %v597
  %599 = vst.msk [vmem:[#allocation2 + $0x10] sm:$0xff] %vm362, %v597
  %v600 = vpack.c.bf16 %v597, %v597
  %v602 = vsel %vm365, %v600, 0
  %604 = vmatprep.subr.bf16.mxu0 0
  %605 = vmatpush1.bf16.msra.mxu0 %v356
  %606 = vmatprep.subr.bf16.mxu0 0
  %607 = vmatpush1.bf16.msra.mxu0 %v357
  %608 = vmatprep.subr.bf16.mxu0 0
  %609 = vmatpush1.bf16.msra.mxu0 %v358
  %610 = vmatprep.subr.bf16.mxu0 0
  %611 = vmatpush1.bf16.msra.mxu0 %v359
  %612 = vmatprep.subr.bf16.mxu0 0
  %613 = vmatpush1.bf16.msra.mxu0 0
  %614 = vmatprep.subr.bf16.mxu0 0
  %615 = vmatpush1.bf16.msra.mxu0 0
  %616 = vmatprep.subr.bf16.mxu0 0
  %617 = vmatpush1.bf16.msra.mxu0 0
  %618 = vmatprep.subr.bf16.mxu0 0
  %619 = vmatpush1.bf16.msra.mxu0 0
  %620 = vmatprep.subr.bf16.mxu0 0
  %621 = vmatpush1.bf16.msra.mxu0 0
  %622 = vmatprep.subr.bf16.mxu0 0
  %623 = vmatpush1.bf16.msra.mxu0 0
  %624 = vmatprep.subr.bf16.mxu0 0
  %625 = vmatpush1.bf16.msra.mxu0 0
  %626 = vmatprep.subr.bf16.mxu0 0
  %627 = vmatpush1.bf16.msra.mxu0 0
  %628 = vmatprep.subr.bf16.mxu0 0
  %629 = vmatpush1.bf16.msra.mxu0 0
  %630 = vmatprep.subr.bf16.mxu0 0
  %631 = vmatpush1.bf16.msra.mxu0 0
  %632 = vmatprep.subr.bf16.mxu0 0
  %633 = vmatpush1.bf16.msra.mxu0 0
  %634 = vmatprep.subr.bf16.mxu0 0
  %635 = vmatpush1.bf16.msra.mxu0 0
  %636 = vmatprep.mubr.bf16.mxu0 0
  %637 = vmatmul.mubr.bf16.gmra.mrb[0].mxu0 %v602
  %v638 = vpop.f32.mrb[0].mxu0
  %v639 = vadd.f32 %v346, %v638
  %v640 = vpop.f32.mrb[0].mxu0
  %v641 = vpop.f32.mrb[0].mxu0
  %v642 = vpop.f32.mrb[0].mxu0
  %643 = vdwg.mxu0
  %v644 = vtanh.pop %v639
  %645 = vst.msk [vmem:[#allocation2 + $0x30] sm:$0xff] %vm133, %v644
  %646 = vst.msk [vmem:[#allocation2 + $0x8] sm:$0xff] %vm362, %v644
  %v647 = vpack.c.bf16 %v644, %v644
  %v649 = vsel %vm365, %v647, 0
  %651 = vmatprep.subr.bf16.mxu0 0
  %652 = vmatpush1.bf16.msra.mxu0 %v356
  %653 = vmatprep.subr.bf16.mxu0 0
  %654 = vmatpush1.bf16.msra.mxu0 %v357
  %655 = vmatprep.subr.bf16.mxu0 0
  %656 = vmatpush1.bf16.msra.mxu0 %v358
  %657 = vmatprep.subr.bf16.mxu0 0
  %658 = vmatpush1.bf16.msra.mxu0 %v359
  %659 = vmatprep.subr.bf16.mxu0 0
  %660 = vmatpush1.bf16.msra.mxu0 0
  %661 = vmatprep.subr.bf16.mxu0 0
  %662 = vmatpush1.bf16.msra.mxu0 0
  %663 = vmatprep.subr.bf16.mxu0 0
  %664 = vmatpush1.bf16.msra.mxu0 0
  %665 = vmatprep.subr.bf16.mxu0 0
  %666 = vmatpush1.bf16.msra.mxu0 0
  %667 = vmatprep.subr.bf16.mxu0 0
  %668 = vmatpush1.bf16.msra.mxu0 0
  %669 = vmatprep.subr.bf16.mxu0 0
  %670 = vmatpush1.bf16.msra.mxu0 0
  %671 = vmatprep.subr.bf16.mxu0 0
  %672 = vmatpush1.bf16.msra.mxu0 0
  %673 = vmatprep.subr.bf16.mxu0 0
  %674 = vmatpush1.bf16.msra.mxu0 0
  %675 = vmatprep.subr.bf16.mxu0 0
  %676 = vmatpush1.bf16.msra.mxu0 0
  %677 = vmatprep.subr.bf16.mxu0 0
  %678 = vmatpush1.bf16.msra.mxu0 0
  %679 = vmatprep.subr.bf16.mxu0 0
  %680 = vmatpush1.bf16.msra.mxu0 0
  %681 = vmatprep.subr.bf16.mxu0 0
  %682 = vmatpush1.bf16.msra.mxu0 0
  %683 = vmatprep.mubr.bf16.mxu0 0
  %684 = vmatmul.mubr.bf16.gmra.mrb[0].mxu0 %v649
  %v685 = vpop.f32.mrb[0].mxu0
  %v686 = vadd.f32 %v347, %v685
  %v687 = vpop.f32.mrb[0].mxu0
  %v688 = vpop.f32.mrb[0].mxu0
  %v689 = vpop.f32.mrb[0].mxu0
  %690 = vdwg.mxu0
  %v691 = vtanh.pop %v686
  %692 = vst.msk [vmem:[#allocation2 + $0x38] sm:$0xff] %vm133, %v691
  %693 = vst.msk [vmem:[#allocation2] sm:$0xff] %vm362, %v691
  %v694 = vld [vmem:[#allocation2] sm:$0xff]
  %v695 = vld [vmem:[#allocation2 + $0x8] sm:$0xff]
  %v696 = vld [vmem:[#allocation2 + $0x10] sm:$0xff]
  %v697 = vld [vmem:[#allocation2 + $0x18] sm:$0xff]
  %v698 = vld [vmem:[#allocation2 + $0x20] sm:$0xff]
  %v699 = vld [vmem:[#allocation2 + $0x28] sm:$0xff]
  %v700 = vld [vmem:[#allocation2 + $0x30] sm:$0xff]
  %v701 = vld [vmem:[#allocation2 + $0x38] sm:$0xff]
  %v702 = vld [vmem:[%s2] sm:$0xff]
  %v703 = vld [vmem:[%s2 + $0x8] sm:$0xff]
  %v704 = vld [vmem:[%s2 + $0x10] sm:$0xff]
  %v705 = vld [vmem:[%s2 + $0x18] sm:$0xff]
  %v706 = vld [vmem:[%s2 + $0x20] sm:$0xff]
  %v707 = vld [vmem:[%s2 + $0x28] sm:$0xff]
  %v708 = vld [vmem:[%s2 + $0x30] sm:$0xff]
  %v709 = vld [vmem:[%s2 + $0x38] sm:$0xff]
  %v710 = vld [vmem:[%s2 + $0xa0] sm:$0x1]
  %v711 = vlaneseq
  %v712 = vshrl.u32 %v711, 7
  %v713 = vsub.s32 0, %v712
  %v714 = vrot.slane %v710, %v713
  %v716 = vsel %vm365, %v694, 0
  %v719 = vsel %vm365, %v695, 0
  %v722 = vsel %vm365, %v696, 0
  %v725 = vsel %vm365, %v697, 0
  %v728 = vsel %vm365, %v698, 0
  %v731 = vsel %vm365, %v699, 0
  %v734 = vsel %vm365, %v700, 0
  %v737 = vsel %vm365, %v701, 0
  %739 = vmatprep.subr.mxu0 0.0
  %740 = vmatpush1.msra.mxu0 %v702
  %741 = vmatprep.subr.mxu0 0.0
  %742 = vmatpush1.msra.mxu0 %v703
  %743 = vmatprep.subr.mxu0 0.0
  %744 = vmatpush1.msra.mxu0 %v704
  %745 = vmatprep.subr.mxu0 0.0
  %746 = vmatpush1.msra.mxu0 %v705
  %747 = vmatprep.subr.mxu0 0.0
  %748 = vmatpush1.msra.mxu0 %v706
  %749 = vmatprep.subr.mxu0 0.0
  %750 = vmatpush1.msra.mxu0 %v707
  %751 = vmatprep.subr.mxu0 0.0
  %752 = vmatpush1.msra.mxu0 %v708
  %753 = vmatprep.subr.mxu0 0.0
  %754 = vmatpush1.msra.mxu0 %v709
  %755 = vmatprep.subr.mxu0 0.0
  %756 = vmatpush1.msra.mxu0 0.0
  %757 = vmatprep.subr.mxu0 0.0
  %758 = vmatpush1.msra.mxu0 0.0
  %759 = vmatprep.subr.mxu0 0.0
  %760 = vmatpush1.msra.mxu0 0.0
  %761 = vmatprep.subr.mxu0 0.0
  %762 = vmatpush1.msra.mxu0 0.0
  %763 = vmatprep.subr.mxu0 0.0
  %764 = vmatpush1.msra.mxu0 0.0
  %765 = vmatprep.subr.mxu0 0.0
  %766 = vmatpush1.msra.mxu0 0.0
  %767 = vmatprep.subr.mxu0 0.0
  %768 = vmatpush1.msra.mxu0 0.0
  %769 = vmatprep.subr.mxu0 0.0
  %770 = vmatpush1.msra.mxu0 0.0
  %771 = vmatprep.subr.mxu0 0.0
  %772 = vmatpush1.msra.mxu0 0.0
  %773 = vmatprep.subr.mxu0 0.0
  %774 = vmatpush1.msra.mxu0 0.0
  %775 = vmatprep.subr.mxu0 0.0
  %776 = vmatpush1.msra.mxu0 0.0
  %777 = vmatprep.subr.mxu0 0.0
  %778 = vmatpush1.msra.mxu0 0.0
  %779 = vmatprep.subr.mxu0 0.0
  %780 = vmatpush1.msra.mxu0 0.0
  %781 = vmatprep.subr.mxu0 0.0
  %782 = vmatpush1.msra.mxu0 0.0
  %783 = vmatprep.subr.mxu0 0.0
  %784 = vmatpush1.msra.mxu0 0.0
  %785 = vmatprep.subr.mxu0 0.0
  %786 = vmatpush1.msra.mxu0 0.0
  %787 = vmatprep.subr.mxu0 0.0
  %788 = vmatpush1.msra.mxu0 0.0
  %789 = vmatprep.subr.mxu0 0.0
  %790 = vmatpush1.msra.mxu0 0.0
  %791 = vmatprep.subr.mxu0 0.0
  %792 = vmatpush1.msra.mxu0 0.0
  %793 = vmatprep.subr.mxu0 0.0
  %794 = vmatpush1.msra.mxu0 0.0
  %795 = vmatprep.subr.mxu0 0.0
  %796 = vmatpush1.msra.mxu0 0.0
  %797 = vmatprep.subr.mxu0 0.0
  %798 = vmatpush1.msra.mxu0 0.0
  %799 = vmatprep.subr.mxu0 0.0
  %800 = vmatpush1.msra.mxu0 0.0
  %801 = vmatprep.subr.mxu0 0.0
  %802 = vmatpush1.msra.mxu0 0.0
  %803 = vmatprep.mubr.f32.mxu0 0.0
  %804 = vmatmul.mubr.f32.gmra.mrb[0].mxu0 %v716
  %v805 = vpop.f32.mrb[0].mxu0
  %v806 = vadd.f32 %v714, %v805
  %v807 = vpop.f32.mrb[0].mxu0
  %808 = vmatprep.mubr.f32.mxu0 0.0
  %809 = vmatmul.mubr.f32.gmra.mrb[0].mxu0 %v719
  %v810 = vpop.f32.mrb[0].mxu0
  %v811 = vadd.f32 %v714, %v810
  %v812 = vpop.f32.mrb[0].mxu0
  %813 = vmatprep.mubr.f32.mxu0 0.0
  %814 = vmatmul.mubr.f32.gmra.mrb[0].mxu0 %v722
  %v815 = vpop.f32.mrb[0].mxu0
  %v816 = vadd.f32 %v714, %v815
  %v817 = vpop.f32.mrb[0].mxu0
  %818 = vmatprep.mubr.f32.mxu0 0.0
  %819 = vmatmul.mubr.f32.gmra.mrb[0].mxu0 %v725
  %v820 = vpop.f32.mrb[0].mxu0
  %v821 = vadd.f32 %v714, %v820
  %v822 = vpop.f32.mrb[0].mxu0
  %823 = vmatprep.mubr.f32.mxu0 0.0
  %824 = vmatmul.mubr.f32.gmra.mrb[0].mxu0 %v728
  %v825 = vpop.f32.mrb[0].mxu0
  %v826 = vadd.f32 %v714, %v825
  %v827 = vpop.f32.mrb[0].mxu0
  %828 = vmatprep.mubr.f32.mxu0 0.0
  %829 = vmatmul.mubr.f32.gmra.mrb[0].mxu0 %v731
  %v830 = vpop.f32.mrb[0].mxu0
  %v831 = vadd.f32 %v714, %v830
  %v832 = vpop.f32.mrb[0].mxu0
  %833 = vmatprep.mubr.f32.mxu0 0.0
  %834 = vmatmul.mubr.f32.gmra.mrb[0].mxu0 %v734
  %v835 = vpop.f32.mrb[0].mxu0
  %v836 = vadd.f32 %v714, %v835
  %v837 = vpop.f32.mrb[0].mxu0
  %838 = vmatprep.mubr.f32.mxu0 0.0
  %839 = vmatmul.mubr.f32.gmra.mrb[0].mxu0 %v737
  %v840 = vpop.f32.mrb[0].mxu0
  %v841 = vadd.f32 %v714, %v840
  %v842 = vpop.f32.mrb[0].mxu0
  %843 = vdwg.mxu0
  %v844 = vld [vmem:[%s2 + $0x40] sm:$0xff]
  %v845 = vld [vmem:[%s2 + $0x48] sm:$0xff]
  %v846 = vld [vmem:[%s2 + $0x50] sm:$0xff]
  %v847 = vld [vmem:[%s2 + $0x58] sm:$0xff]
  %v848 = vld [vmem:[%s2 + $0x60] sm:$0xff]
  %v849 = vld [vmem:[%s2 + $0x68] sm:$0xff]
  %v850 = vld [vmem:[%s2 + $0x70] sm:$0xff]
  %v851 = vld [vmem:[%s2 + $0x78] sm:$0xff]
  %v852 = vld [vmem:[%s2 + $0xa8] sm:$0x1]
  %v853 = vlaneseq
  %v854 = vshrl.u32 %v853, 7
  %v855 = vsub.s32 0, %v854
  %v856 = vrot.slane %v852, %v855
  %857 = vmatprep.subr.mxu0 0.0
  %858 = vmatpush1.msra.mxu0 %v844
  %859 = vmatprep.subr.mxu0 0.0
  %860 = vmatpush1.msra.mxu0 %v845
  %861 = vmatprep.subr.mxu0 0.0
  %862 = vmatpush1.msra.mxu0 %v846
  %863 = vmatprep.subr.mxu0 0.0
  %864 = vmatpush1.msra.mxu0 %v847
  %865 = vmatprep.subr.mxu0 0.0
  %866 = vmatpush1.msra.mxu0 %v848
  %867 = vmatprep.subr.mxu0 0.0
  %868 = vmatpush1.msra.mxu0 %v849
  %869 = vmatprep.subr.mxu0 0.0
  %870 = vmatpush1.msra.mxu0 %v850
  %871 = vmatprep.subr.mxu0 0.0
  %872 = vmatpush1.msra.mxu0 %v851
  %873 = vmatprep.subr.mxu0 0.0
  %874 = vmatpush1.msra.mxu0 0.0
  %875 = vmatprep.subr.mxu0 0.0
  %876 = vmatpush1.msra.mxu0 0.0
  %877 = vmatprep.subr.mxu0 0.0
  %878 = vmatpush1.msra.mxu0 0.0
  %879 = vmatprep.subr.mxu0 0.0
  %880 = vmatpush1.msra.mxu0 0.0
  %881 = vmatprep.subr.mxu0 0.0
  %882 = vmatpush1.msra.mxu0 0.0
  %883 = vmatprep.subr.mxu0 0.0
  %884 = vmatpush1.msra.mxu0 0.0
  %885 = vmatprep.subr.mxu0 0.0
  %886 = vmatpush1.msra.mxu0 0.0
  %887 = vmatprep.subr.mxu0 0.0
  %888 = vmatpush1.msra.mxu0 0.0
  %889 = vmatprep.subr.mxu0 0.0
  %890 = vmatpush1.msra.mxu0 0.0
  %891 = vmatprep.subr.mxu0 0.0
  %892 = vmatpush1.msra.mxu0 0.0
  %893 = vmatprep.subr.mxu0 0.0
  %894 = vmatpush1.msra.mxu0 0.0
  %895 = vmatprep.subr.mxu0 0.0
  %896 = vmatpush1.msra.mxu0 0.0
  %897 = vmatprep.subr.mxu0 0.0
  %898 = vmatpush1.msra.mxu0 0.0
  %899 = vmatprep.subr.mxu0 0.0
  %900 = vmatpush1.msra.mxu0 0.0
  %901 = vmatprep.subr.mxu0 0.0
  %902 = vmatpush1.msra.mxu0 0.0
  %903 = vmatprep.subr.mxu0 0.0
  %904 = vmatpush1.msra.mxu0 0.0
  %905 = vmatprep.subr.mxu0 0.0
  %906 = vmatpush1.msra.mxu0 0.0
  %907 = vmatprep.subr.mxu0 0.0
  %908 = vmatpush1.msra.mxu0 0.0
  %909 = vmatprep.subr.mxu0 0.0
  %910 = vmatpush1.msra.mxu0 0.0
  %911 = vmatprep.subr.mxu0 0.0
  %912 = vmatpush1.msra.mxu0 0.0
  %913 = vmatprep.subr.mxu0 0.0
  %914 = vmatpush1.msra.mxu0 0.0
  %915 = vmatprep.subr.mxu0 0.0
  %916 = vmatpush1.msra.mxu0 0.0
  %917 = vmatprep.subr.mxu0 0.0
  %918 = vmatpush1.msra.mxu0 0.0
  %919 = vmatprep.subr.mxu0 0.0
  %920 = vmatpush1.msra.mxu0 0.0
  %921 = vmatprep.mubr.f32.mxu0 0.0
  %922 = vmatmul.mubr.f32.gmra.mrb[0].mxu0 %v737
  %v923 = vpop.f32.mrb[0].mxu0
  %v924 = vadd.f32 %v856, %v923
  %v925 = vpop.f32.mrb[0].mxu0
  %926 = vdwg.mxu0
  %v927 = vtanh.pop %v924
  %v928 = vld [vmem:[%s2 + $0x80] sm:$0xff]
  %v929 = vld [vmem:[%s2 + $0x88] sm:$0xff]
  %v930 = vld [vmem:[%s2 + $0x90] sm:$0xff]
  %v931 = vld [vmem:[%s2 + $0x98] sm:$0xff]
  %v932 = vpack.c.bf16 %v929, %v928
  %v933 = vpack.c.bf16 %v931, %v930
  %v934 = vtanh.pop %v806
  %v935 = vpack.c.bf16 %v934, %v934
  %v937 = vsel %vm133, %v935, 0
  %939 = vmatprep.subr.bf16.mxu0 0
  %940 = vmatpush1.bf16.msra.mxu0 %v932
  %941 = vmatprep.subr.bf16.mxu0 0
  %942 = vmatpush1.bf16.msra.mxu0 %v933
  %943 = vmatprep.subr.bf16.mxu0 0
  %944 = vmatpush1.bf16.msra.mxu0 0
  %945 = vmatprep.subr.bf16.mxu0 0
  %946 = vmatpush1.bf16.msra.mxu0 0
  %947 = vmatprep.subr.bf16.mxu0 0
  %948 = vmatpush1.bf16.msra.mxu0 0
  %949 = vmatprep.subr.bf16.mxu0 0
  %950 = vmatpush1.bf16.msra.mxu0 0
  %951 = vmatprep.subr.bf16.mxu0 0
  %952 = vmatpush1.bf16.msra.mxu0 0
  %953 = vmatprep.subr.bf16.mxu0 0
  %954 = vmatpush1.bf16.msra.mxu0 0
  %955 = vmatprep.subr.bf16.mxu0 0
  %956 = vmatpush1.bf16.msra.mxu0 0
  %957 = vmatprep.subr.bf16.mxu0 0
  %958 = vmatpush1.bf16.msra.mxu0 0
  %959 = vmatprep.subr.bf16.mxu0 0
  %960 = vmatpush1.bf16.msra.mxu0 0
  %961 = vmatprep.subr.bf16.mxu0 0
  %962 = vmatpush1.bf16.msra.mxu0 0
  %963 = vmatprep.subr.bf16.mxu0 0
  %964 = vmatpush1.bf16.msra.mxu0 0
  %965 = vmatprep.subr.bf16.mxu0 0
  %966 = vmatpush1.bf16.msra.mxu0 0
  %967 = vmatprep.subr.bf16.mxu0 0
  %968 = vmatpush1.bf16.msra.mxu0 0
  %969 = vmatprep.subr.bf16.mxu0 0
  %970 = vmatpush1.bf16.msra.mxu0 0
  %971 = vmatprep.mubr.bf16.mxu0 0
  %972 = vmatmul.mubr.bf16.gmra.mrb[0].mxu0 %v937
  %v973 = vpop.f32.mrb[0].mxu0
  %v974 = vadd.f32 %v811, %v973
  %v975 = vpop.f32.mrb[0].mxu0
  %v976 = vpop.f32.mrb[0].mxu0
  %v977 = vpop.f32.mrb[0].mxu0
  %978 = vdwg.mxu0
  %v979 = vtanh.pop %v974
  %v980 = vpack.c.bf16 %v979, %v979
  %v982 = vsel %vm133, %v980, 0
  %984 = vmatprep.subr.bf16.mxu0 0
  %985 = vmatpush1.bf16.msra.mxu0 %v932
  %986 = vmatprep.subr.bf16.mxu0 0
  %987 = vmatpush1.bf16.msra.mxu0 %v933
  %988 = vmatprep.subr.bf16.mxu0 0
  %989 = vmatpush1.bf16.msra.mxu0 0
  %990 = vmatprep.subr.bf16.mxu0 0
  %991 = vmatpush1.bf16.msra.mxu0 0
  %992 = vmatprep.subr.bf16.mxu0 0
  %993 = vmatpush1.bf16.msra.mxu0 0
  %994 = vmatprep.subr.bf16.mxu0 0
  %995 = vmatpush1.bf16.msra.mxu0 0
  %996 = vmatprep.subr.bf16.mxu0 0
  %997 = vmatpush1.bf16.msra.mxu0 0
  %998 = vmatprep.subr.bf16.mxu0 0
  %999 = vmatpush1.bf16.msra.mxu0 0
  %1000 = vmatprep.subr.bf16.mxu0 0
  %1001 = vmatpush1.bf16.msra.mxu0 0
  %1002 = vmatprep.subr.bf16.mxu0 0
  %1003 = vmatpush1.bf16.msra.mxu0 0
  %1004 = vmatprep.subr.bf16.mxu0 0
  %1005 = vmatpush1.bf16.msra.mxu0 0
  %1006 = vmatprep.subr.bf16.mxu0 0
  %1007 = vmatpush1.bf16.msra.mxu0 0
  %1008 = vmatprep.subr.bf16.mxu0 0
  %1009 = vmatpush1.bf16.msra.mxu0 0
  %1010 = vmatprep.subr.bf16.mxu0 0
  %1011 = vmatpush1.bf16.msra.mxu0 0
  %1012 = vmatprep.subr.bf16.mxu0 0
  %1013 = vmatpush1.bf16.msra.mxu0 0
  %1014 = vmatprep.subr.bf16.mxu0 0
  %1015 = vmatpush1.bf16.msra.mxu0 0
  %1016 = vmatprep.mubr.bf16.mxu0 0
  %1017 = vmatmul.mubr.bf16.gmra.mrb[0].mxu0 %v982
  %v1018 = vpop.f32.mrb[0].mxu0
  %v1019 = vadd.f32 %v816, %v1018
  %v1020 = vpop.f32.mrb[0].mxu0
  %v1021 = vpop.f32.mrb[0].mxu0
  %v1022 = vpop.f32.mrb[0].mxu0
  %1023 = vdwg.mxu0
  %v1024 = vtanh.pop %v1019
  %v1025 = vpack.c.bf16 %v1024, %v1024
  %v1027 = vsel %vm133, %v1025, 0
  %1029 = vmatprep.subr.bf16.mxu0 0
  %1030 = vmatpush1.bf16.msra.mxu0 %v932
  %1031 = vmatprep.subr.bf16.mxu0 0
  %1032 = vmatpush1.bf16.msra.mxu0 %v933
  %1033 = vmatprep.subr.bf16.mxu0 0
  %1034 = vmatpush1.bf16.msra.mxu0 0
  %1035 = vmatprep.subr.bf16.mxu0 0
  %1036 = vmatpush1.bf16.msra.mxu0 0
  %1037 = vmatprep.subr.bf16.mxu0 0
  %1038 = vmatpush1.bf16.msra.mxu0 0
  %1039 = vmatprep.subr.bf16.mxu0 0
  %1040 = vmatpush1.bf16.msra.mxu0 0
  %1041 = vmatprep.subr.bf16.mxu0 0
  %1042 = vmatpush1.bf16.msra.mxu0 0
  %1043 = vmatprep.subr.bf16.mxu0 0
  %1044 = vmatpush1.bf16.msra.mxu0 0
  %1045 = vmatprep.subr.bf16.mxu0 0
  %1046 = vmatpush1.bf16.msra.mxu0 0
  %1047 = vmatprep.subr.bf16.mxu0 0
  %1048 = vmatpush1.bf16.msra.mxu0 0
  %1049 = vmatprep.subr.bf16.mxu0 0
  %1050 = vmatpush1.bf16.msra.mxu0 0
  %1051 = vmatprep.subr.bf16.mxu0 0
  %1052 = vmatpush1.bf16.msra.mxu0 0
  %1053 = vmatprep.subr.bf16.mxu0 0
  %1054 = vmatpush1.bf16.msra.mxu0 0
  %1055 = vmatprep.subr.bf16.mxu0 0
  %1056 = vmatpush1.bf16.msra.mxu0 0
  %1057 = vmatprep.subr.bf16.mxu0 0
  %1058 = vmatpush1.bf16.msra.mxu0 0
  %1059 = vmatprep.subr.bf16.mxu0 0
  %1060 = vmatpush1.bf16.msra.mxu0 0
  %1061 = vmatprep.mubr.bf16.mxu0 0
  %1062 = vmatmul.mubr.bf16.gmra.mrb[0].mxu0 %v1027
  %v1063 = vpop.f32.mrb[0].mxu0
  %v1064 = vadd.f32 %v821, %v1063
  %v1065 = vpop.f32.mrb[0].mxu0
  %v1066 = vpop.f32.mrb[0].mxu0
  %v1067 = vpop.f32.mrb[0].mxu0
  %1068 = vdwg.mxu0
  %v1069 = vtanh.pop %v1064
  %v1070 = vpack.c.bf16 %v1069, %v1069
  %v1072 = vsel %vm133, %v1070, 0
  %1074 = vmatprep.subr.bf16.mxu0 0
  %1075 = vmatpush1.bf16.msra.mxu0 %v932
  %1076 = vmatprep.subr.bf16.mxu0 0
  %1077 = vmatpush1.bf16.msra.mxu0 %v933
  %1078 = vmatprep.subr.bf16.mxu0 0
  %1079 = vmatpush1.bf16.msra.mxu0 0
  %1080 = vmatprep.subr.bf16.mxu0 0
  %1081 = vmatpush1.bf16.msra.mxu0 0
  %1082 = vmatprep.subr.bf16.mxu0 0
  %1083 = vmatpush1.bf16.msra.mxu0 0
  %1084 = vmatprep.subr.bf16.mxu0 0
  %1085 = vmatpush1.bf16.msra.mxu0 0
  %1086 = vmatprep.subr.bf16.mxu0 0
  %1087 = vmatpush1.bf16.msra.mxu0 0
  %1088 = vmatprep.subr.bf16.mxu0 0
  %1089 = vmatpush1.bf16.msra.mxu0 0
  %1090 = vmatprep.subr.bf16.mxu0 0
  %1091 = vmatpush1.bf16.msra.mxu0 0
  %1092 = vmatprep.subr.bf16.mxu0 0
  %1093 = vmatpush1.bf16.msra.mxu0 0
  %1094 = vmatprep.subr.bf16.mxu0 0
  %1095 = vmatpush1.bf16.msra.mxu0 0
  %1096 = vmatprep.subr.bf16.mxu0 0
  %1097 = vmatpush1.bf16.msra.mxu0 0
  %1098 = vmatprep.subr.bf16.mxu0 0
  %1099 = vmatpush1.bf16.msra.mxu0 0
  %1100 = vmatprep.subr.bf16.mxu0 0
  %1101 = vmatpush1.bf16.msra.mxu0 0
  %1102 = vmatprep.subr.bf16.mxu0 0
  %1103 = vmatpush1.bf16.msra.mxu0 0
  %1104 = vmatprep.subr.bf16.mxu0 0
  %1105 = vmatpush1.bf16.msra.mxu0 0
  %1106 = vmatprep.mubr.bf16.mxu0 0
  %1107 = vmatmul.mubr.bf16.gmra.mrb[0].mxu0 %v1072
  %v1108 = vpop.f32.mrb[0].mxu0
  %v1109 = vadd.f32 %v826, %v1108
  %v1110 = vpop.f32.mrb[0].mxu0
  %v1111 = vpop.f32.mrb[0].mxu0
  %v1112 = vpop.f32.mrb[0].mxu0
  %1113 = vdwg.mxu0
  %v1114 = vtanh.pop %v1109
  %v1115 = vpack.c.bf16 %v1114, %v1114
  %v1117 = vsel %vm133, %v1115, 0
  %1119 = vmatprep.subr.bf16.mxu0 0
  %1120 = vmatpush1.bf16.msra.mxu0 %v932
  %1121 = vmatprep.subr.bf16.mxu0 0
  %1122 = vmatpush1.bf16.msra.mxu0 %v933
  %1123 = vmatprep.subr.bf16.mxu0 0
  %1124 = vmatpush1.bf16.msra.mxu0 0
  %1125 = vmatprep.subr.bf16.mxu0 0
  %1126 = vmatpush1.bf16.msra.mxu0 0
  %1127 = vmatprep.subr.bf16.mxu0 0
  %1128 = vmatpush1.bf16.msra.mxu0 0
  %1129 = vmatprep.subr.bf16.mxu0 0
  %1130 = vmatpush1.bf16.msra.mxu0 0
  %1131 = vmatprep.subr.bf16.mxu0 0
  %1132 = vmatpush1.bf16.msra.mxu0 0
  %1133 = vmatprep.subr.bf16.mxu0 0
  %1134 = vmatpush1.bf16.msra.mxu0 0
  %1135 = vmatprep.subr.bf16.mxu0 0
  %1136 = vmatpush1.bf16.msra.mxu0 0
  %1137 = vmatprep.subr.bf16.mxu0 0
  %1138 = vmatpush1.bf16.msra.mxu0 0
  %1139 = vmatprep.subr.bf16.mxu0 0
  %1140 = vmatpush1.bf16.msra.mxu0 0
  %1141 = vmatprep.subr.bf16.mxu0 0
  %1142 = vmatpush1.bf16.msra.mxu0 0
  %1143 = vmatprep.subr.bf16.mxu0 0
  %1144 = vmatpush1.bf16.msra.mxu0 0
  %1145 = vmatprep.subr.bf16.mxu0 0
  %1146 = vmatpush1.bf16.msra.mxu0 0
  %1147 = vmatprep.subr.bf16.mxu0 0
  %1148 = vmatpush1.bf16.msra.mxu0 0
  %1149 = vmatprep.subr.bf16.mxu0 0
  %1150 = vmatpush1.bf16.msra.mxu0 0
  %1151 = vmatprep.mubr.bf16.mxu0 0
  %1152 = vmatmul.mubr.bf16.gmra.mrb[0].mxu0 %v1117
  %v1153 = vpop.f32.mrb[0].mxu0
  %v1154 = vadd.f32 %v831, %v1153
  %v1155 = vpop.f32.mrb[0].mxu0
  %v1156 = vpop.f32.mrb[0].mxu0
  %v1157 = vpop.f32.mrb[0].mxu0
  %1158 = vdwg.mxu0
  %v1159 = vtanh.pop %v1154
  %v1160 = vpack.c.bf16 %v1159, %v1159
  %v1162 = vsel %vm133, %v1160, 0
  %1164 = vmatprep.subr.bf16.mxu0 0
  %1165 = vmatpush1.bf16.msra.mxu0 %v932
  %1166 = vmatprep.subr.bf16.mxu0 0
  %1167 = vmatpush1.bf16.msra.mxu0 %v933
  %1168 = vmatprep.subr.bf16.mxu0 0
  %1169 = vmatpush1.bf16.msra.mxu0 0
  %1170 = vmatprep.subr.bf16.mxu0 0
  %1171 = vmatpush1.bf16.msra.mxu0 0
  %1172 = vmatprep.subr.bf16.mxu0 0
  %1173 = vmatpush1.bf16.msra.mxu0 0
  %1174 = vmatprep.subr.bf16.mxu0 0
  %1175 = vmatpush1.bf16.msra.mxu0 0
  %1176 = vmatprep.subr.bf16.mxu0 0
  %1177 = vmatpush1.bf16.msra.mxu0 0
  %1178 = vmatprep.subr.bf16.mxu0 0
  %1179 = vmatpush1.bf16.msra.mxu0 0
  %1180 = vmatprep.subr.bf16.mxu0 0
  %1181 = vmatpush1.bf16.msra.mxu0 0
  %1182 = vmatprep.subr.bf16.mxu0 0
  %1183 = vmatpush1.bf16.msra.mxu0 0
  %1184 = vmatprep.subr.bf16.mxu0 0
  %1185 = vmatpush1.bf16.msra.mxu0 0
  %1186 = vmatprep.subr.bf16.mxu0 0
  %1187 = vmatpush1.bf16.msra.mxu0 0
  %1188 = vmatprep.subr.bf16.mxu0 0
  %1189 = vmatpush1.bf16.msra.mxu0 0
  %1190 = vmatprep.subr.bf16.mxu0 0
  %1191 = vmatpush1.bf16.msra.mxu0 0
  %1192 = vmatprep.subr.bf16.mxu0 0
  %1193 = vmatpush1.bf16.msra.mxu0 0
  %1194 = vmatprep.subr.bf16.mxu0 0
  %1195 = vmatpush1.bf16.msra.mxu0 0
  %1196 = vmatprep.mubr.bf16.mxu0 0
  %1197 = vmatmul.mubr.bf16.gmra.mrb[0].mxu0 %v1162
  %v1198 = vpop.f32.mrb[0].mxu0
  %v1199 = vadd.f32 %v836, %v1198
  %v1200 = vpop.f32.mrb[0].mxu0
  %v1201 = vpop.f32.mrb[0].mxu0
  %v1202 = vpop.f32.mrb[0].mxu0
  %1203 = vdwg.mxu0
  %v1204 = vtanh.pop %v1199
  %v1205 = vpack.c.bf16 %v1204, %v1204
  %v1207 = vsel %vm133, %v1205, 0
  %1209 = vmatprep.subr.bf16.mxu0 0
  %1210 = vmatpush1.bf16.msra.mxu0 %v932
  %1211 = vmatprep.subr.bf16.mxu0 0
  %1212 = vmatpush1.bf16.msra.mxu0 %v933
  %1213 = vmatprep.subr.bf16.mxu0 0
  %1214 = vmatpush1.bf16.msra.mxu0 0
  %1215 = vmatprep.subr.bf16.mxu0 0
  %1216 = vmatpush1.bf16.msra.mxu0 0
  %1217 = vmatprep.subr.bf16.mxu0 0
  %1218 = vmatpush1.bf16.msra.mxu0 0
  %1219 = vmatprep.subr.bf16.mxu0 0
  %1220 = vmatpush1.bf16.msra.mxu0 0
  %1221 = vmatprep.subr.bf16.mxu0 0
  %1222 = vmatpush1.bf16.msra.mxu0 0
  %1223 = vmatprep.subr.bf16.mxu0 0
  %1224 = vmatpush1.bf16.msra.mxu0 0
  %1225 = vmatprep.subr.bf16.mxu0 0
  %1226 = vmatpush1.bf16.msra.mxu0 0
  %1227 = vmatprep.subr.bf16.mxu0 0
  %1228 = vmatpush1.bf16.msra.mxu0 0
  %1229 = vmatprep.subr.bf16.mxu0 0
  %1230 = vmatpush1.bf16.msra.mxu0 0
  %1231 = vmatprep.subr.bf16.mxu0 0
  %1232 = vmatpush1.bf16.msra.mxu0 0
  %1233 = vmatprep.subr.bf16.mxu0 0
  %1234 = vmatpush1.bf16.msra.mxu0 0
  %1235 = vmatprep.subr.bf16.mxu0 0
  %1236 = vmatpush1.bf16.msra.mxu0 0
  %1237 = vmatprep.subr.bf16.mxu0 0
  %1238 = vmatpush1.bf16.msra.mxu0 0
  %1239 = vmatprep.subr.bf16.mxu0 0
  %1240 = vmatpush1.bf16.msra.mxu0 0
  %1241 = vmatprep.mubr.bf16.mxu0 0
  %1242 = vmatmul.mubr.bf16.gmra.mrb[0].mxu0 %v1207
  %v1243 = vpop.f32.mrb[0].mxu0
  %v1244 = vadd.f32 %v841, %v1243
  %v1245 = vpop.f32.mrb[0].mxu0
  %v1246 = vpop.f32.mrb[0].mxu0
  %v1247 = vpop.f32.mrb[0].mxu0
  %1248 = vdwg.mxu0
  %v1249 = vtanh.pop %v1244
  %1251 = vrot.lane.b32.xlu0 %v927, 32
  %v1252 = vpop.permute.xlu0 %1251
  %v1254 = vsel %vm133, %v1249, %v1252
  %v1255 = vmul.f32 %v1254, %v1254
  %v1256 = vsel %vm365, %v1255, 0.0
  %1257 = vadd.xlane.f32.xlu0 %v1256
  %v1258 = vpop.xlane.xlu0 %1257
  %vm1259 = vcmp.gt.f32.partialorder %v1258, 1.0
  %v1260 = vrsqrt.pop %v1258
  %v1261 = vsel %vm1259, %v1260, 1.0
  %v1262 = vmul.f32 %v1254, %v1261
  %vm1263 = vcmask 517120
  %v1264 = vsel %vm1263, %v1262, 0.0
  %v1265 = vrot.slane %v1264, 4
  %v1266 = vadd.f32 %v1264, %v1265
  %v1267 = vrot.slane %v1266, 2
  %v1268 = vadd.f32 %v1266, %v1267
  %v1269 = vrot.slane %v1268, 1
  %v1270 = vadd.f32 %v1268, %v1269
  %v1271 = vrcp.pop 2.0
  %v1272 = vmul.f32 %v1270, %v1271
  %v1273 = vmul.f32 %v1272, %v1272
  %vm1274 = vcmask 516096
  %v1275 = vsel %vm1274, %v1273, 0.0
  %1276 = vadd.xlane.f32.xlu0 %v1275
  %v1277 = vpop.xlane.xlu0 %1276
  %v1278 = vrot.slane %v1277, 4
  %v1279 = vadd.f32 %v1277, %v1278
  %v1280 = vrot.slane %v1279, 2
  %v1281 = vadd.f32 %v1279, %v1280
  %v1282 = vrot.slane %v1281, 1
  %v1283 = vadd.f32 %v1281, %v1282
  %s1284 = vtos %v1283
  %v1285 = vstv %s1284
  %v1286 = vrsqrt.pop %v1285
  %s1287 = vtos %v1286
  %v1288 = vstv %s1287
  %v1289 = vmul.f32 %v1272, %v1288
  %v1290 = vmul.f32 %v1262, %v1289
  %v1291 = vsel %vm1263, %v1290, 0.0
  %1292 = vadd.xlane.f32.xlu0 %v1291
  %v1293 = vpop.xlane.xlu0 %1292
  %vm1294 = vcmask 519170
  %v1295 = vsel %vm1294, %v1290, 0.0
  %1296 = vadd.xlane.f32.xlu0 %v1295
  %v1297 = vpop.xlane.xlu0 %1296
  %vm1298 = vcmask 1024
  %v1299 = vsel %vm1298, %v1293, 0.0
  %1300 = vadd.xlane.f32.xlu0 %v1299
  %v1301 = vpop.xlane.xlu0 %1300
  %v1302 = vrot.slane %v1301, 4
  %v1303 = vadd.f32 %v1301, %v1302
  %v1304 = vrot.slane %v1303, 2
  %v1305 = vadd.f32 %v1303, %v1304
  %v1306 = vrot.slane %v1305, 1
  %v1307 = vadd.f32 %v1305, %v1306
  %s1308 = vtos %v1307
  %v1309 = vrcp.pop 2.0
  %s1310 = vtos %v1309
  %s1311 = smul.f32 %s1308, %s1310
  %s1312 = ssub.f32 1.0, %s1311
  %v1313 = vmax.f32 %v1297, 0.7
  %v1315 = vrot.slane %v1313, 2
  %v1317 = vsel %vm1298, %v1315, 0.0
  %1318 = vadd.xlane.f32.xlu0 %v1317
  %v1319 = vpop.xlane.xlu0 %1318
  %v1320 = vrot.slane %v1319, 4
  %v1321 = vadd.f32 %v1319, %v1320
  %v1322 = vrot.slane %v1321, 2
  %v1323 = vadd.f32 %v1321, %v1322
  %v1324 = vrot.slane %v1323, 1
  %v1325 = vadd.f32 %v1323, %v1324
  %s1326 = vtos %v1325
  %v1327 = vrcp.pop 2.0
  %s1328 = vtos %v1327
  %s1329 = smul.f32 %s1326, %s1328
  %s1330 = sadd.f32 %s1329, -0.7
  %v1331 = vstv %s1312
  %v1332 = vstv %s1330
  %vm1333 = vcmask 7168
  %v1334 = vsel %vm1333, %v1331, %v1332
  %vm1335 = vcmask 8192
  %1336 = vst.msk [vmem:[%s3] sm:$0x1] %vm1335, %v1334
  // Predicated region
  $region14: #{style_disperser_forward.1} parent=0 // pred_check
    _
  $region15: #{style_disperser_forward.1} parent=0 // pred_check_branch
    %1338 = sbr.rel (0) target = $region17
  $region16: #{style_disperser_forward.1} parent=0 // pred_region
    _
  $region17: #{style_disperser_forward.1} parent=0 // pred_fallthru
    _
  // Predicated region
  $region18: #{style_disperser_forward.1} parent=0 // pred_check
    _
  $region19: #{style_disperser_forward.1} parent=0 // pred_check_branch
    %1340 = sbr.rel (0) target = $region21
  $region20: #{style_disperser_forward.1} parent=0 // pred_region
    _
  $region21: #{style_disperser_forward.1} parent=0 // pred_fallthru
    _

</llo_original>
